<compile_context>
chip_gen: v6e
topology: v6e:2x2x1
jax: 0.10.0
libtpu: 0.0.40
codegen_flags: <defaults>
</compile_context>

<pallas_src>
import jax
import jax.numpy as jnp
from jax.experimental import pallas as pl
from jax.experimental.pallas import tpu as pltpu

KSZ = 3   # 3x3x3 depthwise kernel, stride=1, padding=1
TD = 8    # output depth slabs per grid step == f32 sublane count -> full vregs


def _make_kernel(td, plane_pitch):
    """plane_pitch = W + 2 (row pitch of the zero-padded plane)."""

    def kernel(xa_ref, xb_ref, wd_ref, wp_ref, b_ref, out_ref, win_ref):
        # xa_ref : (1, C, td, P128)  padded depth slabs [t*td, t*td+td)
        # xb_ref : (1, C, td, P128)  padded depth slabs [t*td+td, t*td+2*td) (only first 2 used)
        # wd_ref : (C*td, 27)        depthwise taps, rows repeated per slab (c-major)
        # wp_ref : (O, C)            pointwise weights
        # b_ref  : (O, 1)            fused bias  wp @ bd + bp
        # out_ref: (1, O, td, P128)
        # win_ref: (C, td+2, P128)   VMEM scratch: depth window [t*td, t*td+td+2)
        _, C, _, P128 = xa_ref.shape
        O = wp_ref.shape[0]

        a = xa_ref[0].astype(jnp.float32)                        # (C, td, P128)
        win_ref[:, 0:td, :] = a
        win_ref[:, td:td + 2, :] = xb_ref[0, :, 0:2, :].astype(jnp.float32)

        # Depth-offset views for every output slab j (rows ordered c*td + j):
        xm = a.reshape(C * td, P128)                             # depth offset -1
        xc = win_ref[:, 1:td + 1, :].reshape(C * td, P128)       # depth offset  0
        xp = win_ref[:, 2:td + 2, :].reshape(C * td, P128)       # depth offset +1

        wdv = wd_ref[...]                                        # (C*td, 27), loaded once

        # --- depthwise 3x3x3: combine depth first, then one in-plane roll per (kh,kw) ---
        acc = None
        for kh in range(KSZ):
            for kw in range(KSZ):
                t0 = kh * KSZ + kw                               # tap index for kd = 0
                y = (wdv[:, t0:t0 + 1] * xm
                     + wdv[:, t0 + 9:t0 + 10] * xc
                     + wdv[:, t0 + 18:t0 + 19] * xp)             # (C*td, P128)
                s = (kh - 1) * plane_pitch + (kw - 1)            # in-plane flat shift
                if s != 0:
                    # shifted[p] = y[p + s]; valid output lanes never wrap (pre-padded plane).
                    y = pltpu.roll(y, shift=(-s) % P128, axis=1)
                acc = y if acc is None else acc + y

        # --- pointwise 1x1x1: per-slab (O,C)@(C,P128) MXU matmuls, lane-dense N = P128 ---
        wpm = wp_ref[...]                                        # (O, C)
        bias = b_ref[...]                                        # (O, 1)
        acc3 = acc.reshape(C, td, P128)
        for j in range(td):
            oj = jnp.dot(wpm, acc3[:, j, :], preferred_element_type=jnp.float32)
            out_ref[0, :, j, :] = (oj + bias).astype(out_ref.dtype)

    return kernel


def depthwise_separable_conv3d(x_ncdhw, wd, bd, wp, bp, *, storage_dtype=jnp.float32):
    """x_ncdhw: (N, C, D, H, W).
    wd: (C, 1, 3, 3, 3), bd: (C,), wp: (O, C, 1, 1, 1), bp: (O,).
    Returns (N, O, D, H, W), matching PyTorch's forward (depthwise then pointwise conv)."""
    N, C, D, H, W = x_ncdhw.shape
    O = wp.shape[0]
    Hp, Wp = H + 2, W + 2
    P = Hp * Wp
    P128 = ((P + 127) // 128) * 128          # lane-pad the flattened plane to a multiple of 128
    T = -(-D // TD)                          # depth tiles
    d_out_store = T * TD                     # stored output depth (>= D)
    d_in_store = (T + 1) * TD                # stored padded input depth (covers view t+1)

    # Zero pre-pad: 1 slab/row/col of conv padding + depth slack for the tiled views.
    x_pad = jnp.pad(x_ncdhw.astype(storage_dtype),
                    ((0, 0), (0, 0), (1, d_in_store - (D + 1)), (1, 1), (1, 1)))
    x_flat = x_pad.reshape(N, C, d_in_store, P)
    if P128 != P:
        x_flat = jnp.pad(x_flat, ((0, 0), (0, 0), (0, 0), (0, P128 - P)))

    wd_k = wd.reshape(C, KSZ ** 3).astype(jnp.float32)           # (C, 27), tap = kd*9 + kh*3 + kw
    wd_exp = jnp.repeat(wd_k, TD, axis=0)                        # (C*TD, 27): row c*TD + j
    wp_k = wp.reshape(O, C).astype(jnp.float32)                  # (O, C)
    # Fold the depthwise bias through the pointwise conv: wp @ bd + bp.
    b_fused = (wp_k @ bd.astype(jnp.float32).reshape(C, 1)
               + bp.astype(jnp.float32).reshape(O, 1))           # (O, 1)

    kernel = _make_kernel(TD, Wp)

    out_store = pl.pallas_call(
        kernel,
        out_shape=jax.ShapeDtypeStruct((N, O, d_out_store, P128), jnp.float32),
        grid_spec=pltpu.PrefetchScalarGridSpec(
            num_scalar_prefetch=0,
            grid=(N, T),
            in_specs=[
                # Two Blocked views of the SAME padded array give the +1-tile depth halo.
                pl.BlockSpec((1, C, TD, P128), lambda n, t: (n, 0, t, 0)),
                pl.BlockSpec((1, C, TD, P128), lambda n, t: (n, 0, t + 1, 0)),
                # Small parameters: constant block index -> staged once, no re-DMA per step.
                pl.BlockSpec((C * TD, KSZ ** 3), lambda n, t: (0, 0)),
                pl.BlockSpec((O, C), lambda n, t: (0, 0)),
                pl.BlockSpec((O, 1), lambda n, t: (0, 0)),
            ],
            out_specs=pl.BlockSpec((1, O, TD, P128), lambda n, t: (n, 0, t, 0)),
            scratch_shapes=[pltpu.VMEM((C, TD + 2, P128), jnp.float32)],
        ),
        compiler_params=pltpu.CompilerParams(
            dimension_semantics=("parallel", "parallel"),
            vmem_limit_bytes=48 * 1024 * 1024,   # explicit: safe on v5e/v6e (128 MiB) and v7x (64 MiB)
        ),
    )(x_flat, x_flat, wd_exp, wp_k, b_fused)

    # (N, O, T*TD, P128) -> (N, O, D, H, W): drop depth/lane slack and the plane halo.
    out = out_store[:, :, :D, :P].reshape(N, O, D, Hp, Wp)[:, :, :, 1:H + 1, 1:W + 1]
    return out


def _reference(x, wd, bd, wp, bp):
    """Pure-JAX reference using lax conv (matches torch.nn.Conv3d semantics)."""
    dn1 = jax.lax.conv_dimension_numbers(x.shape, wd.shape, ("NCDHW", "OIDHW", "NCDHW"))
    y = jax.lax.conv_general_dilated(
        x, wd, window_strides=(1, 1, 1),
        padding=((1, 1), (1, 1), (1, 1)),
        dimension_numbers=dn1, feature_group_count=x.shape[1])
    y = y + bd[None, :, None, None, None]
    dn2 = jax.lax.conv_dimension_numbers(y.shape, wp.shape, ("NCDHW", "OIDHW", "NCDHW"))
    z = jax.lax.conv_general_dilated(
        y, wp, window_strides=(1, 1, 1), padding="VALID", dimension_numbers=dn2)
    return z + bp[None, :, None, None, None]


if __name__ == "__main__":
    # Small shapes consistent with the module: N=2, C_in=4, C_out=8, D=H=W=8.
    N, C_in, C_out, D, H, W = 2, 4, 8, 8, 8, 8

    key = jax.random.PRNGKey(0)
    kx, kwd, kbd, kwp, kbp = jax.random.split(key, 5)

    x = jax.random.normal(kx, (N, C_in, D, H, W), jnp.float32)
    # Parameter shapes per nn.Conv3d: depthwise weight (C,1,3,3,3), pointwise (O,C,1,1,1).
    wd = jax.random.normal(kwd, (C_in, 1, KSZ, KSZ, KSZ), jnp.float32) * 0.1
    bd = jax.random.normal(kbd, (C_in,), jnp.float32) * 0.1
    wp = jax.random.normal(kwp, (C_out, C_in, 1, 1, 1), jnp.float32) * 0.1
    bp = jax.random.normal(kbp, (C_out,), jnp.float32) * 0.1

    out = jax.block_until_ready(depthwise_separable_conv3d(x, wd, bd, wp, bp))
    ref = jax.block_until_ready(_reference(x, wd, bd, wp, bp))

    assert out.shape == (N, C_out, D, H, W), out.shape
    if not bool(jnp.allclose(out, ref, atol=1e-4, rtol=1e-4)):
        raise AssertionError("Pallas kernel does not match reference conv")

    print("KERNEL_OK")
</pallas_src>

<mosaic_0001>
module attributes {stable_mosaic.version = 11 : i64} {
  func.func @kernel(%arg0: i32, %arg1: i32, %arg2: memref<1x4x8x128xf32, #tpu.memory_space<vmem>>, %arg3: memref<1x4x8x128xf32, #tpu.memory_space<vmem>>, %arg4: memref<32x27xf32, #tpu.memory_space<vmem>>, %arg5: memref<8x4xf32, #tpu.memory_space<vmem>>, %arg6: memref<8x1xf32, #tpu.memory_space<vmem>>, %arg7: memref<1x8x8x128xf32, #tpu.memory_space<vmem>>, %arg8: memref<4x10x128xf32, #tpu.memory_space<vmem>>) attributes {dimension_semantics = [#tpu.dimension_semantics<parallel>, #tpu.dimension_semantics<parallel>], iteration_bounds = array<i64: 2, 1>, scalar_prefetch = 0 : i64, scratch_operands = 1 : i64, tpu.core_type = #tpu.core_type<tc>, window_params = [{transform_indices = @transform_0, window_bounds = array<i64: 1, 4, 8, 128>}, {transform_indices = @transform_1, window_bounds = array<i64: 1, 4, 8, 128>}, {pipeline_mode = #tpu.pipeline_mode<synchronous>, transform_indices = @transform_2, window_bounds = array<i64: 32, 27>}, {pipeline_mode = #tpu.pipeline_mode<synchronous>, transform_indices = @transform_3, window_bounds = array<i64: 8, 4>}, {pipeline_mode = #tpu.pipeline_mode<synchronous>, transform_indices = @transform_4, window_bounds = array<i64: 8, 1>}, {transform_indices = @transform_5, window_bounds = array<i64: 1, 8, 8, 128>}]} {
    %c0 = arith.constant 0 : index
    %c0_0 = arith.constant 0 : index
    %c0_1 = arith.constant 0 : index
    %c0_2 = arith.constant 0 : index
    %0 = vector.load %arg2[%c0, %c0_0, %c0_1, %c0_2] : memref<1x4x8x128xf32, #tpu.memory_space<vmem>>, vector<1x4x8x128xf32>
    %1 = vector.shape_cast %0 : vector<1x4x8x128xf32> to vector<4x8x128xf32>
    %c0_3 = arith.constant 0 : index
    %c0_4 = arith.constant 0 : index
    %c0_5 = arith.constant 0 : index
    %2 = vector.load %arg8[%c0_3, %c0_4, %c0_5] : memref<4x10x128xf32, #tpu.memory_space<vmem>>, vector<4x8x128xf32>
    tpu.vector_store %arg8[%c0_3, %c0_4, %c0_5], %1 {strides = array<i32>} : memref<4x10x128xf32, #tpu.memory_space<vmem>>, vector<4x8x128xf32>,
    %c0_6 = arith.constant 0 : index
    %c0_7 = arith.constant 0 : index
    %c0_8 = arith.constant 0 : index
    %c0_9 = arith.constant 0 : index
    %3 = vector.load %arg3[%c0_6, %c0_7, %c0_8, %c0_9] : memref<1x4x8x128xf32, #tpu.memory_space<vmem>>, vector<1x4x2x128xf32>
    %4 = vector.shape_cast %3 : vector<1x4x2x128xf32> to vector<4x2x128xf32>
    %c0_10 = arith.constant 0 : index
    %c8 = arith.constant 8 : index
    %c0_11 = arith.constant 0 : index
    %5 = vector.load %arg8[%c0_10, %c8, %c0_11] : memref<4x10x128xf32, #tpu.memory_space<vmem>>, vector<4x2x128xf32>
    tpu.vector_store %arg8[%c0_10, %c8, %c0_11], %4 {strides = array<i32>} : memref<4x10x128xf32, #tpu.memory_space<vmem>>, vector<4x2x128xf32>,
    %6 = vector.shape_cast %1 : vector<4x8x128xf32> to vector<32x128xf32>
    %c0_12 = arith.constant 0 : index
    %c1 = arith.constant 1 : index
    %c0_13 = arith.constant 0 : index
    %7 = vector.load %arg8[%c0_12, %c1, %c0_13] : memref<4x10x128xf32, #tpu.memory_space<vmem>>, vector<4x8x128xf32>
    %8 = vector.shape_cast %7 : vector<4x8x128xf32> to vector<32x128xf32>
    %c0_14 = arith.constant 0 : index
    %c2 = arith.constant 2 : index
    %c0_15 = arith.constant 0 : index
    %9 = vector.load %arg8[%c0_14, %c2, %c0_15] : memref<4x10x128xf32, #tpu.memory_space<vmem>>, vector<4x8x128xf32>
    %10 = vector.shape_cast %9 : vector<4x8x128xf32> to vector<32x128xf32>
    %c0_16 = arith.constant 0 : index
    %c0_17 = arith.constant 0 : index
    %11 = vector.load %arg4[%c0_16, %c0_17] : memref<32x27xf32, #tpu.memory_space<vmem>>, vector<32x27xf32>
    %12 = vector.extract_strided_slice %11 {offsets = [0, 0], sizes = [32, 1], strides = [1, 1]} : vector<32x27xf32> to vector<32x1xf32>
    %13 = vector.broadcast %12 : vector<32x1xf32> to vector<32x128xf32>
    %14 = arith.mulf %13, %6 : vector<32x128xf32>
    %15 = vector.extract_strided_slice %11 {offsets = [0, 9], sizes = [32, 1], strides = [1, 1]} : vector<32x27xf32> to vector<32x1xf32>
    %16 = vector.broadcast %15 : vector<32x1xf32> to vector<32x128xf32>
    %17 = arith.mulf %16, %8 : vector<32x128xf32>
    %18 = arith.addf %14, %17 : vector<32x128xf32>
    %19 = vector.extract_strided_slice %11 {offsets = [0, 18], sizes = [32, 1], strides = [1, 1]} : vector<32x27xf32> to vector<32x1xf32>
    %20 = vector.broadcast %19 : vector<32x1xf32> to vector<32x128xf32>
    %21 = arith.mulf %20, %10 : vector<32x128xf32>
    %22 = arith.addf %18, %21 : vector<32x128xf32>
    %c11_i32 = arith.constant 11 : i32
    %23 = tpu.dynamic_rotate %22 by %c11_i32 dim 1 : vector<32x128xf32>, i32 -> vector<32x128xf32>
    %24 = vector.extract_strided_slice %11 {offsets = [0, 1], sizes = [32, 1], strides = [1, 1]} : vector<32x27xf32> to vector<32x1xf32>
    %25 = vector.broadcast %24 : vector<32x1xf32> to vector<32x128xf32>
    %26 = arith.mulf %25, %6 : vector<32x128xf32>
    %27 = vector.extract_strided_slice %11 {offsets = [0, 10], sizes = [32, 1], strides = [1, 1]} : vector<32x27xf32> to vector<32x1xf32>
    %28 = vector.broadcast %27 : vector<32x1xf32> to vector<32x128xf32>
    %29 = arith.mulf %28, %8 : vector<32x128xf32>
    %30 = arith.addf %26, %29 : vector<32x128xf32>
    %31 = vector.extract_strided_slice %11 {offsets = [0, 19], sizes = [32, 1], strides = [1, 1]} : vector<32x27xf32> to vector<32x1xf32>
    %32 = vector.broadcast %31 : vector<32x1xf32> to vector<32x128xf32>
    %33 = arith.mulf %32, %10 : vector<32x128xf32>
    %34 = arith.addf %30, %33 : vector<32x128xf32>
    %c10_i32 = arith.constant 10 : i32
    %35 = tpu.dynamic_rotate %34 by %c10_i32 dim 1 : vector<32x128xf32>, i32 -> vector<32x128xf32>
    %36 = arith.addf %23, %35 : vector<32x128xf32>
    %37 = vector.extract_strided_slice %11 {offsets = [0, 2], sizes = [32, 1], strides = [1, 1]} : vector<32x27xf32> to vector<32x1xf32>
    %38 = vector.broadcast %37 : vector<32x1xf32> to vector<32x128xf32>
    %39 = arith.mulf %38, %6 : vector<32x128xf32>
    %40 = vector.extract_strided_slice %11 {offsets = [0, 11], sizes = [32, 1], strides = [1, 1]} : vector<32x27xf32> to vector<32x1xf32>
    %41 = vector.broadcast %40 : vector<32x1xf32> to vector<32x128xf32>
    %42 = arith.mulf %41, %8 : vector<32x128xf32>
    %43 = arith.addf %39, %42 : vector<32x128xf32>
    %44 = vector.extract_strided_slice %11 {offsets = [0, 20], sizes = [32, 1], strides = [1, 1]} : vector<32x27xf32> to vector<32x1xf32>
    %45 = vector.broadcast %44 : vector<32x1xf32> to vector<32x128xf32>
    %46 = arith.mulf %45, %10 : vector<32x128xf32>
    %47 = arith.addf %43, %46 : vector<32x128xf32>
    %c9_i32 = arith.constant 9 : i32
    %48 = tpu.dynamic_rotate %47 by %c9_i32 dim 1 : vector<32x128xf32>, i32 -> vector<32x128xf32>
    %49 = arith.addf %36, %48 : vector<32x128xf32>
    %50 = vector.extract_strided_slice %11 {offsets = [0, 3], sizes = [32, 1], strides = [1, 1]} : vector<32x27xf32> to vector<32x1xf32>
    %51 = vector.broadcast %50 : vector<32x1xf32> to vector<32x128xf32>
    %52 = arith.mulf %51, %6 : vector<32x128xf32>
    %53 = vector.extract_strided_slice %11 {offsets = [0, 12], sizes = [32, 1], strides = [1, 1]} : vector<32x27xf32> to vector<32x1xf32>
    %54 = vector.broadcast %53 : vector<32x1xf32> to vector<32x128xf32>
    %55 = arith.mulf %54, %8 : vector<32x128xf32>
    %56 = arith.addf %52, %55 : vector<32x128xf32>
    %57 = vector.extract_strided_slice %11 {offsets = [0, 21], sizes = [32, 1], strides = [1, 1]} : vector<32x27xf32> to vector<32x1xf32>
    %58 = vector.broadcast %57 : vector<32x1xf32> to vector<32x128xf32>
    %59 = arith.mulf %58, %10 : vector<32x128xf32>
    %60 = arith.addf %56, %59 : vector<32x128xf32>
    %c1_i32 = arith.constant 1 : i32
    %61 = tpu.dynamic_rotate %60 by %c1_i32 dim 1 : vector<32x128xf32>, i32 -> vector<32x128xf32>
    %62 = arith.addf %49, %61 : vector<32x128xf32>
    %63 = vector.extract_strided_slice %11 {offsets = [0, 4], sizes = [32, 1], strides = [1, 1]} : vector<32x27xf32> to vector<32x1xf32>
    %64 = vector.broadcast %63 : vector<32x1xf32> to vector<32x128xf32>
    %65 = arith.mulf %64, %6 : vector<32x128xf32>
    %66 = vector.extract_strided_slice %11 {offsets = [0, 13], sizes = [32, 1], strides = [1, 1]} : vector<32x27xf32> to vector<32x1xf32>
    %67 = vector.broadcast %66 : vector<32x1xf32> to vector<32x128xf32>
    %68 = arith.mulf %67, %8 : vector<32x128xf32>
    %69 = arith.addf %65, %68 : vector<32x128xf32>
    %70 = vector.extract_strided_slice %11 {offsets = [0, 22], sizes = [32, 1], strides = [1, 1]} : vector<32x27xf32> to vector<32x1xf32>
    %71 = vector.broadcast %70 : vector<32x1xf32> to vector<32x128xf32>
    %72 = arith.mulf %71, %10 : vector<32x128xf32>
    %73 = arith.addf %69, %72 : vector<32x128xf32>
    %74 = arith.addf %62, %73 : vector<32x128xf32>
    %75 = vector.extract_strided_slice %11 {offsets = [0, 5], sizes = [32, 1], strides = [1, 1]} : vector<32x27xf32> to vector<32x1xf32>
    %76 = vector.broadcast %75 : vector<32x1xf32> to vector<32x128xf32>
    %77 = arith.mulf %76, %6 : vector<32x128xf32>
    %78 = vector.extract_strided_slice %11 {offsets = [0, 14], sizes = [32, 1], strides = [1, 1]} : vector<32x27xf32> to vector<32x1xf32>
    %79 = vector.broadcast %78 : vector<32x1xf32> to vector<32x128xf32>
    %80 = arith.mulf %79, %8 : vector<32x128xf32>
    %81 = arith.addf %77, %80 : vector<32x128xf32>
    %82 = vector.extract_strided_slice %11 {offsets = [0, 23], sizes = [32, 1], strides = [1, 1]} : vector<32x27xf32> to vector<32x1xf32>
    %83 = vector.broadcast %82 : vector<32x1xf32> to vector<32x128xf32>
    %84 = arith.mulf %83, %10 : vector<32x128xf32>
    %85 = arith.addf %81, %84 : vector<32x128xf32>
    %c127_i32 = arith.constant 127 : i32
    %86 = tpu.dynamic_rotate %85 by %c127_i32 dim 1 : vector<32x128xf32>, i32 -> vector<32x128xf32>
    %87 = arith.addf %74, %86 : vector<32x128xf32>
    %88 = vector.extract_strided_slice %11 {offsets = [0, 6], sizes = [32, 1], strides = [1, 1]} : vector<32x27xf32> to vector<32x1xf32>
    %89 = vector.broadcast %88 : vector<32x1xf32> to vector<32x128xf32>
    %90 = arith.mulf %89, %6 : vector<32x128xf32>
    %91 = vector.extract_strided_slice %11 {offsets = [0, 15], sizes = [32, 1], strides = [1, 1]} : vector<32x27xf32> to vector<32x1xf32>
    %92 = vector.broadcast %91 : vector<32x1xf32> to vector<32x128xf32>
    %93 = arith.mulf %92, %8 : vector<32x128xf32>
    %94 = arith.addf %90, %93 : vector<32x128xf32>
    %95 = vector.extract_strided_slice %11 {offsets = [0, 24], sizes = [32, 1], strides = [1, 1]} : vector<32x27xf32> to vector<32x1xf32>
    %96 = vector.broadcast %95 : vector<32x1xf32> to vector<32x128xf32>
    %97 = arith.mulf %96, %10 : vector<32x128xf32>
    %98 = arith.addf %94, %97 : vector<32x128xf32>
    %c119_i32 = arith.constant 119 : i32
    %99 = tpu.dynamic_rotate %98 by %c119_i32 dim 1 : vector<32x128xf32>, i32 -> vector<32x128xf32>
    %100 = arith.addf %87, %99 : vector<32x128xf32>
    %101 = vector.extract_strided_slice %11 {offsets = [0, 7], sizes = [32, 1], strides = [1, 1]} : vector<32x27xf32> to vector<32x1xf32>
    %102 = vector.broadcast %101 : vector<32x1xf32> to vector<32x128xf32>
    %103 = arith.mulf %102, %6 : vector<32x128xf32>
    %104 = vector.extract_strided_slice %11 {offsets = [0, 16], sizes = [32, 1], strides = [1, 1]} : vector<32x27xf32> to vector<32x1xf32>
    %105 = vector.broadcast %104 : vector<32x1xf32> to vector<32x128xf32>
    %106 = arith.mulf %105, %8 : vector<32x128xf32>
    %107 = arith.addf %103, %106 : vector<32x128xf32>
    %108 = vector.extract_strided_slice %11 {offsets = [0, 25], sizes = [32, 1], strides = [1, 1]} : vector<32x27xf32> to vector<32x1xf32>
    %109 = vector.broadcast %108 : vector<32x1xf32> to vector<32x128xf32>
    %110 = arith.mulf %109, %10 : vector<32x128xf32>
    %111 = arith.addf %107, %110 : vector<32x128xf32>
    %c118_i32 = arith.constant 118 : i32
    %112 = tpu.dynamic_rotate %111 by %c118_i32 dim 1 : vector<32x128xf32>, i32 -> vector<32x128xf32>
    %113 = arith.addf %100, %112 : vector<32x128xf32>
    %114 = vector.extract_strided_slice %11 {offsets = [0, 8], sizes = [32, 1], strides = [1, 1]} : vector<32x27xf32> to vector<32x1xf32>
    %115 = vector.broadcast %114 : vector<32x1xf32> to vector<32x128xf32>
    %116 = arith.mulf %115, %6 : vector<32x128xf32>
    %117 = vector.extract_strided_slice %11 {offsets = [0, 17], sizes = [32, 1], strides = [1, 1]} : vector<32x27xf32> to vector<32x1xf32>
    %118 = vector.broadcast %117 : vector<32x1xf32> to vector<32x128xf32>
    %119 = arith.mulf %118, %8 : vector<32x128xf32>
    %120 = arith.addf %116, %119 : vector<32x128xf32>
    %121 = vector.extract_strided_slice %11 {offsets = [0, 26], sizes = [32, 1], strides = [1, 1]} : vector<32x27xf32> to vector<32x1xf32>
    %122 = vector.broadcast %121 : vector<32x1xf32> to vector<32x128xf32>
    %123 = arith.mulf %122, %10 : vector<32x128xf32>
    %124 = arith.addf %120, %123 : vector<32x128xf32>
    %c117_i32 = arith.constant 117 : i32
    %125 = tpu.dynamic_rotate %124 by %c117_i32 dim 1 : vector<32x128xf32>, i32 -> vector<32x128xf32>
    %126 = arith.addf %113, %125 : vector<32x128xf32>
    %c0_18 = arith.constant 0 : index
    %c0_19 = arith.constant 0 : index
    %127 = vector.load %arg5[%c0_18, %c0_19] : memref<8x4xf32, #tpu.memory_space<vmem>>, vector<8x4xf32>
    %c0_20 = arith.constant 0 : index
    %c0_21 = arith.constant 0 : index
    %128 = vector.load %arg6[%c0_20, %c0_21] : memref<8x1xf32, #tpu.memory_space<vmem>>, vector<8x1xf32>
    %129 = vector.shape_cast %126 : vector<32x128xf32> to vector<4x8x128xf32>
    %130 = vector.extract_strided_slice %129 {offsets = [0, 0, 0], sizes = [4, 1, 128], strides = [1, 1, 1]} : vector<4x8x128xf32> to vector<4x1x128xf32>
    %131 = vector.shape_cast %130 : vector<4x1x128xf32> to vector<4x128xf32>
    %cst = arith.constant dense<0.000000e+00> : vector<8x128xf32>
    %132 = tpu.matmul %127, %131, %cst {dimension_numbers = #tpu.dot_dimension_numbers<[1], [0], [0], [1], [0, 0, 1, 1], [], []>} : vector<8x4xf32>, vector<4x128xf32>, vector<8x128xf32> -> vector<8x128xf32>
    %133 = vector.broadcast %128 : vector<8x1xf32> to vector<8x128xf32>
    %134 = arith.addf %132, %133 : vector<8x128xf32>
    %c0_22 = arith.constant 0 : index
    %c0_23 = arith.constant 0 : index
    %c0_24 = arith.constant 0 : index
    %c0_25 = arith.constant 0 : index
    %135 = vector.load %arg7[%c0_22, %c0_23, %c0_24, %c0_25] : memref<1x8x8x128xf32, #tpu.memory_space<vmem>>, vector<1x8x1x128xf32>
    %136 = vector.shape_cast %135 : vector<1x8x1x128xf32> to vector<8x128xf32>
    %137 = vector.shape_cast %134 : vector<8x128xf32> to vector<1x8x1x128xf32>
    tpu.vector_store %arg7[%c0_22, %c0_23, %c0_24, %c0_25], %137 {strides = array<i32>} : memref<1x8x8x128xf32, #tpu.memory_space<vmem>>, vector<1x8x1x128xf32>,
    %138 = vector.extract_strided_slice %129 {offsets = [0, 1, 0], sizes = [4, 1, 128], strides = [1, 1, 1]} : vector<4x8x128xf32> to vector<4x1x128xf32>
    %139 = vector.shape_cast %138 : vector<4x1x128xf32> to vector<4x128xf32>
    %cst_26 = arith.constant dense<0.000000e+00> : vector<8x128xf32>
    %140 = tpu.matmul %127, %139, %cst_26 {dimension_numbers = #tpu.dot_dimension_numbers<[1], [0], [0], [1], [0, 0, 1, 1], [], []>} : vector<8x4xf32>, vector<4x128xf32>, vector<8x128xf32> -> vector<8x128xf32>
    %141 = vector.broadcast %128 : vector<8x1xf32> to vector<8x128xf32>
    %142 = arith.addf %140, %141 : vector<8x128xf32>
    %c0_27 = arith.constant 0 : index
    %c0_28 = arith.constant 0 : index
    %c1_29 = arith.constant 1 : index
    %c0_30 = arith.constant 0 : index
    %143 = vector.load %arg7[%c0_27, %c0_28, %c1_29, %c0_30] : memref<1x8x8x128xf32, #tpu.memory_space<vmem>>, vector<1x8x1x128xf32>
    %144 = vector.shape_cast %143 : vector<1x8x1x128xf32> to vector<8x128xf32>
    %145 = vector.shape_cast %142 : vector<8x128xf32> to vector<1x8x1x128xf32>
    tpu.vector_store %arg7[%c0_27, %c0_28, %c1_29, %c0_30], %145 {strides = array<i32>} : memref<1x8x8x128xf32, #tpu.memory_space<vmem>>, vector<1x8x1x128xf32>,
    %146 = vector.extract_strided_slice %129 {offsets = [0, 2, 0], sizes = [4, 1, 128], strides = [1, 1, 1]} : vector<4x8x128xf32> to vector<4x1x128xf32>
    %147 = vector.shape_cast %146 : vector<4x1x128xf32> to vector<4x128xf32>
    %cst_31 = arith.constant dense<0.000000e+00> : vector<8x128xf32>
    %148 = tpu.matmul %127, %147, %cst_31 {dimension_numbers = #tpu.dot_dimension_numbers<[1], [0], [0], [1], [0, 0, 1, 1], [], []>} : vector<8x4xf32>, vector<4x128xf32>, vector<8x128xf32> -> vector<8x128xf32>
    %149 = vector.broadcast %128 : vector<8x1xf32> to vector<8x128xf32>
    %150 = arith.addf %148, %149 : vector<8x128xf32>
    %c0_32 = arith.constant 0 : index
    %c0_33 = arith.constant 0 : index
    %c2_34 = arith.constant 2 : index
    %c0_35 = arith.constant 0 : index
    %151 = vector.load %arg7[%c0_32, %c0_33, %c2_34, %c0_35] : memref<1x8x8x128xf32, #tpu.memory_space<vmem>>, vector<1x8x1x128xf32>
    %152 = vector.shape_cast %151 : vector<1x8x1x128xf32> to vector<8x128xf32>
    %153 = vector.shape_cast %150 : vector<8x128xf32> to vector<1x8x1x128xf32>
    tpu.vector_store %arg7[%c0_32, %c0_33, %c2_34, %c0_35], %153 {strides = array<i32>} : memref<1x8x8x128xf32, #tpu.memory_space<vmem>>, vector<1x8x1x128xf32>,
    %154 = vector.extract_strided_slice %129 {offsets = [0, 3, 0], sizes = [4, 1, 128], strides = [1, 1, 1]} : vector<4x8x128xf32> to vector<4x1x128xf32>
    %155 = vector.shape_cast %154 : vector<4x1x128xf32> to vector<4x128xf32>
    %cst_36 = arith.constant dense<0.000000e+00> : vector<8x128xf32>
    %156 = tpu.matmul %127, %155, %cst_36 {dimension_numbers = #tpu.dot_dimension_numbers<[1], [0], [0], [1], [0, 0, 1, 1], [], []>} : vector<8x4xf32>, vector<4x128xf32>, vector<8x128xf32> -> vector<8x128xf32>
    %157 = vector.broadcast %128 : vector<8x1xf32> to vector<8x128xf32>
    %158 = arith.addf %156, %157 : vector<8x128xf32>
    %c0_37 = arith.constant 0 : index
    %c0_38 = arith.constant 0 : index
    %c3 = arith.constant 3 : index
    %c0_39 = arith.constant 0 : index
    %159 = vector.load %arg7[%c0_37, %c0_38, %c3, %c0_39] : memref<1x8x8x128xf32, #tpu.memory_space<vmem>>, vector<1x8x1x128xf32>
    %160 = vector.shape_cast %159 : vector<1x8x1x128xf32> to vector<8x128xf32>
    %161 = vector.shape_cast %158 : vector<8x128xf32> to vector<1x8x1x128xf32>
    tpu.vector_store %arg7[%c0_37, %c0_38, %c3, %c0_39], %161 {strides = array<i32>} : memref<1x8x8x128xf32, #tpu.memory_space<vmem>>, vector<1x8x1x128xf32>,
    %162 = vector.extract_strided_slice %129 {offsets = [0, 4, 0], sizes = [4, 1, 128], strides = [1, 1, 1]} : vector<4x8x128xf32> to vector<4x1x128xf32>
    %163 = vector.shape_cast %162 : vector<4x1x128xf32> to vector<4x128xf32>
    %cst_40 = arith.constant dense<0.000000e+00> : vector<8x128xf32>
    %164 = tpu.matmul %127, %163, %cst_40 {dimension_numbers = #tpu.dot_dimension_numbers<[1], [0], [0], [1], [0, 0, 1, 1], [], []>} : vector<8x4xf32>, vector<4x128xf32>, vector<8x128xf32> -> vector<8x128xf32>
    %165 = vector.broadcast %128 : vector<8x1xf32> to vector<8x128xf32>
    %166 = arith.addf %164, %165 : vector<8x128xf32>
    %c0_41 = arith.constant 0 : index
    %c0_42 = arith.constant 0 : index
    %c4 = arith.constant 4 : index
    %c0_43 = arith.constant 0 : index
    %167 = vector.load %arg7[%c0_41, %c0_42, %c4, %c0_43] : memref<1x8x8x128xf32, #tpu.memory_space<vmem>>, vector<1x8x1x128xf32>
    %168 = vector.shape_cast %167 : vector<1x8x1x128xf32> to vector<8x128xf32>
    %169 = vector.shape_cast %166 : vector<8x128xf32> to vector<1x8x1x128xf32>
    tpu.vector_store %arg7[%c0_41, %c0_42, %c4, %c0_43], %169 {strides = array<i32>} : memref<1x8x8x128xf32, #tpu.memory_space<vmem>>, vector<1x8x1x128xf32>,
    %170 = vector.extract_strided_slice %129 {offsets = [0, 5, 0], sizes = [4, 1, 128], strides = [1, 1, 1]} : vector<4x8x128xf32> to vector<4x1x128xf32>
    %171 = vector.shape_cast %170 : vector<4x1x128xf32> to vector<4x128xf32>
    %cst_44 = arith.constant dense<0.000000e+00> : vector<8x128xf32>
    %172 = tpu.matmul %127, %171, %cst_44 {dimension_numbers = #tpu.dot_dimension_numbers<[1], [0], [0], [1], [0, 0, 1, 1], [], []>} : vector<8x4xf32>, vector<4x128xf32>, vector<8x128xf32> -> vector<8x128xf32>
    %173 = vector.broadcast %128 : vector<8x1xf32> to vector<8x128xf32>
    %174 = arith.addf %172, %173 : vector<8x128xf32>
    %c0_45 = arith.constant 0 : index
    %c0_46 = arith.constant 0 : index
    %c5 = arith.constant 5 : index
    %c0_47 = arith.constant 0 : index
    %175 = vector.load %arg7[%c0_45, %c0_46, %c5, %c0_47] : memref<1x8x8x128xf32, #tpu.memory_space<vmem>>, vector<1x8x1x128xf32>
    %176 = vector.shape_cast %175 : vector<1x8x1x128xf32> to vector<8x128xf32>
    %177 = vector.shape_cast %174 : vector<8x128xf32> to vector<1x8x1x128xf32>
    tpu.vector_store %arg7[%c0_45, %c0_46, %c5, %c0_47], %177 {strides = array<i32>} : memref<1x8x8x128xf32, #tpu.memory_space<vmem>>, vector<1x8x1x128xf32>,
    %178 = vector.extract_strided_slice %129 {offsets = [0, 6, 0], sizes = [4, 1, 128], strides = [1, 1, 1]} : vector<4x8x128xf32> to vector<4x1x128xf32>
    %179 = vector.shape_cast %178 : vector<4x1x128xf32> to vector<4x128xf32>
    %cst_48 = arith.constant dense<0.000000e+00> : vector<8x128xf32>
    %180 = tpu.matmul %127, %179, %cst_48 {dimension_numbers = #tpu.dot_dimension_numbers<[1], [0], [0], [1], [0, 0, 1, 1], [], []>} : vector<8x4xf32>, vector<4x128xf32>, vector<8x128xf32> -> vector<8x128xf32>
    %181 = vector.broadcast %128 : vector<8x1xf32> to vector<8x128xf32>
    %182 = arith.addf %180, %181 : vector<8x128xf32>
    %c0_49 = arith.constant 0 : index
    %c0_50 = arith.constant 0 : index
    %c6 = arith.constant 6 : index
    %c0_51 = arith.constant 0 : index
    %183 = vector.load %arg7[%c0_49, %c0_50, %c6, %c0_51] : memref<1x8x8x128xf32, #tpu.memory_space<vmem>>, vector<1x8x1x128xf32>
    %184 = vector.shape_cast %183 : vector<1x8x1x128xf32> to vector<8x128xf32>
    %185 = vector.shape_cast %182 : vector<8x128xf32> to vector<1x8x1x128xf32>
    tpu.vector_store %arg7[%c0_49, %c0_50, %c6, %c0_51], %185 {strides = array<i32>} : memref<1x8x8x128xf32, #tpu.memory_space<vmem>>, vector<1x8x1x128xf32>,
    %186 = vector.extract_strided_slice %129 {offsets = [0, 7, 0], sizes = [4, 1, 128], strides = [1, 1, 1]} : vector<4x8x128xf32> to vector<4x1x128xf32>
    %187 = vector.shape_cast %186 : vector<4x1x128xf32> to vector<4x128xf32>
    %cst_52 = arith.constant dense<0.000000e+00> : vector<8x128xf32>
    %188 = tpu.matmul %127, %187, %cst_52 {dimension_numbers = #tpu.dot_dimension_numbers<[1], [0], [0], [1], [0, 0, 1, 1], [], []>} : vector<8x4xf32>, vector<4x128xf32>, vector<8x128xf32> -> vector<8x128xf32>
    %189 = vector.broadcast %128 : vector<8x1xf32> to vector<8x128xf32>
    %190 = arith.addf %188, %189 : vector<8x128xf32>
    %c0_53 = arith.constant 0 : index
    %c0_54 = arith.constant 0 : index
    %c7 = arith.constant 7 : index
    %c0_55 = arith.constant 0 : index
    %191 = vector.load %arg7[%c0_53, %c0_54, %c7, %c0_55] : memref<1x8x8x128xf32, #tpu.memory_space<vmem>>, vector<1x8x1x128xf32>
    %192 = vector.shape_cast %191 : vector<1x8x1x128xf32> to vector<8x128xf32>
    %193 = vector.shape_cast %190 : vector<8x128xf32> to vector<1x8x1x128xf32>
    tpu.vector_store %arg7[%c0_53, %c0_54, %c7, %c0_55], %193 {strides = array<i32>} : memref<1x8x8x128xf32, #tpu.memory_space<vmem>>, vector<1x8x1x128xf32>,
    return
  }
  func.func @transform_0(%arg0: i32, %arg1: i32) -> (i32, i32, i32, i32) {
    %c0_i32 = arith.constant 0 : i32
    %c0_i32_0 = arith.constant 0 : i32
    %c0_i32_1 = arith.constant 0 : i32
    return %arg0, %c0_i32, %arg1, %c0_i32_0 : i32, i32, i32, i32
  }
  func.func @transform_1(%arg0: i32, %arg1: i32) -> (i32, i32, i32, i32) {
    %c1_i32 = arith.constant 1 : i32
    %0 = arith.addi %arg1, %c1_i32 : i32
    %c0_i32 = arith.constant 0 : i32
    %c0_i32_0 = arith.constant 0 : i32
    %c0_i32_1 = arith.constant 0 : i32
    return %arg0, %c0_i32, %0, %c0_i32_0 : i32, i32, i32, i32
  }
  func.func @transform_2(%arg0: i32, %arg1: i32) -> (i32, i32) {
    %c0_i32 = arith.constant 0 : i32
    %c0_i32_0 = arith.constant 0 : i32
    %c0_i32_1 = arith.constant 0 : i32
    return %c0_i32, %c0_i32_0 : i32, i32
  }
  func.func @transform_3(%arg0: i32, %arg1: i32) -> (i32, i32) {
    %c0_i32 = arith.constant 0 : i32
    %c0_i32_0 = arith.constant 0 : i32
    %c0_i32_1 = arith.constant 0 : i32
    return %c0_i32, %c0_i32_0 : i32, i32
  }
  func.func @transform_4(%arg0: i32, %arg1: i32) -> (i32, i32) {
    %c0_i32 = arith.constant 0 : i32
    %c0_i32_0 = arith.constant 0 : i32
    %c0_i32_1 = arith.constant 0 : i32
    return %c0_i32, %c0_i32_0 : i32, i32
  }
  func.func @transform_5(%arg0: i32, %arg1: i32) -> (i32, i32, i32, i32) {
    %c0_i32 = arith.constant 0 : i32
    %c0_i32_0 = arith.constant 0 : i32
    %c0_i32_1 = arith.constant 0 : i32
    return %arg0, %c0_i32, %arg1, %c0_i32_0 : i32, i32, i32, i32
  }
}

</mosaic_0001>

<llo_original>
// kernel: tpu_custom_call.1
$region0: #{tpu_custom_call.1}
  #allocation0 [shape = 'u32[]', space=smem, size = 0x4, offset = 0x4, fixed_abs, tag = 'smem constant byte address 0x4 - core index']
  #allocation1 [shape = 'u32[144,128]{1,0:T(1,128)}', space=vmem, size = 0x12000, scoped, tag = 'internal scratch']
  #allocation2 [shape = 'f32[4,10,128]{2,1,0:T(8,128)}', space=vmem, size = 0x8000, scoped, tag = 'scratch operand']
  %s0 = inlined_call_operand.hbm [shape: f32[2,4,16,128], index: 0, kind: input, shape index: {}]
  %s1 = inlined_call_operand.hbm [shape: f32[2,4,16,128], index: 1, kind: input, shape index: {}]
  %s2 = inlined_call_operand.hbm [shape: f32[32,27], index: 2, kind: input, shape index: {}]
  %s3 = inlined_call_operand.vmem [shape: f32[8,4], index: 3, kind: input, shape index: {}]
  %s4 = inlined_call_operand.vmem [shape: f32[8,1], index: 4, kind: input, shape index: {}]
  %s5 = inlined_call_operand.hbm [shape: f32[2,8,8,128], index: 5, kind: output, shape index: {}]
  %s6 = sld [smem:[#allocation0]]
  $region65: #{tpu_custom_call.1} parent=0
    _
  %s8 = ssub.s32 1, %s6
  %s9 = scalar_select 0, %s8, %s6
  $region1: #{tpu_custom_call.1} parent=0
    #allocation3 [shape = 'u8[32768]{0}', space=vmem, size = 0x8000, scoped, tag = 'input window, operand 0']
    #allocation4 [shape = 's32[2]{0}', space=sflag, size = 0x8, scoped, tag = 'scoped memory for tpu_custom_call.1']
    #allocation5 [shape = 's32[2]{0}', space=sflag, size = 0x8, scoped, tag = 'scoped memory for tpu_custom_call.1']
    #allocation6 [shape = 'u8[32768]{0}', space=vmem, size = 0x8000, scoped, tag = 'input window, operand 1']
    #allocation7 [shape = 's32[2]{0}', space=sflag, size = 0x8, scoped, tag = 'scoped memory for tpu_custom_call.1']
    #allocation8 [shape = 'u8[16384]{0}', space=vmem, size = 0x4000, scoped, tag = 'input window, operand 2, single buffered']
    #allocation9 [shape = 'u8[65536]{0}', space=vmem, size = 0x10000, scoped, tag = 'output window, operand 0']
    %10 = vsyncpa [#allocation4], 0
    %s11 = scalar_lea.sflag [#allocation4], 1
    %12 = vsyncpa %s11, 0
    %13 = vsyncpa [#allocation7], 0
    %s14 = scalar_lea.sflag [#allocation7], 1
    %15 = vsyncpa %s14, 0
    %16 = vsyncpa [#allocation5], 0
    %s17 = scalar_lea.sflag [#allocation5], 1
    %18 = vsyncpa %s17, 0
    loop: start=0, step=1, limit=4
    $region2: #{tpu_custom_call.1} parent=1 // loop_pre_header
      _
    $region3: #{tpu_custom_call.1} parent=1 // loop_header
      %s20 = sphi 0, %s24
      %p21 = scmp.ge.s32.totalorder %s20, 4
      %s27 = sphi 0, %s39
      %s28 = sphi 0, %s35
      %s29 = sphi 0, %s27
      %s30 = sphi 0, %s28
      %s31 = sphi 0, %s29
      %s32 = sphi 0, %s30
      %s44 = sphi 0, %s46
      %s47 = sphi 0, %s44
      %s48 = sphi 0, %s47
      %s64 = sphi 0, %s48
      %s74 = sphi 0, %s76
      %s77 = sphi 0, %s74
      %s78 = sphi 0, %s77
      %s94 = sphi 0, %s78
      %s98 = sphi 0, %s98
      %s100 = sphi 0, %s98
      %s101 = sphi 0, %s100
      %s115 = sphi 0, %s101
      %s119 = sphi 0, %s119
      %s121 = sphi 0, %s119
      %s122 = sphi 0, %s121
      %s136 = sphi 0, %s122
      %s140 = sphi 0, %s140
      %s142 = sphi 0, %s140
      %s143 = sphi 0, %s142
      %s157 = sphi 0, %s143
      %s165 = sphi 0, %s167
      %s168 = sphi 0, %s165
      %s169 = sphi 0, %s168
      %s185 = sphi 0, %s169
    $region4: #{tpu_custom_call.1} parent=1 // loop_header_branch
      %23 = sbr.rel (%p21) target = $region8
    $region5: #{tpu_custom_call.1} parent=1 // loop_body
      %s25 = ssub.s32 %s20, 1
      %s26 = ssub.s32 %s20, 2
      %s33 = sadd.s32 1, %s28
      %p34 = scmp.ge.s32.totalorder %s33, 1
      %s35 = scalar_select %p34, 0, %s33
      %s36 = sadd.s32 1, %s27
      %s37 = scalar_select %p34, %s36, %s27
      %p38 = scmp.ge.s32.totalorder %s37, 2
      %s39 = scalar_select %p38, 0, %s37
      %s40 = ssub.s32 %s27, %s39
      %s41 = ssub.s32 %s28, %s35
      %s42 = sor.u32 %s40, %s41
      %p43 = scmp.eq.s32.totalorder %s42, 0
      %s45 = sadd.s32 %s44, 1
      %s46 = scalar_select %p43, %s44, %s45
      %p49 = pneg %p43
      %p50 = scmp.eq.s32.totalorder %s20, 1
      %p51 = por %p49, %p50
      %p52 = scmp.ne.s32.totalorder %s44, %s47
      %p53 = scmp.eq.s32.totalorder %s20, 0
      %p54 = por %p52, %p53
      %p55 = scmp.ne.s32.totalorder %s44, %s47
      %p56 = scmp.eq.s32.totalorder %s25, 1
      %p57 = por %p55, %p56
      %p58 = scmp.ne.s32.totalorder %s47, %s48
      %p59 = scmp.eq.s32.totalorder %s25, 0
      %p60 = por %p58, %p59
      %p61 = scmp.ne.s32.totalorder %s47, %s48
      %p62 = scmp.eq.s32.totalorder %s26, 1
      %p63 = por %p61, %p62
      %p65 = scmp.ne.s32.totalorder %s48, %s64
      %p66 = scmp.eq.s32.totalorder %s26, 0
      %p67 = por %p65, %p66
      %s68 = sadd.s32 %s28, 1
      %s69 = sadd.s32 %s35, 1
      %s70 = ssub.s32 %s27, %s39
      %s71 = ssub.s32 %s68, %s69
      %s72 = sor.u32 %s70, %s71
      %p73 = scmp.eq.s32.totalorder %s72, 0
      %s75 = sadd.s32 %s74, 1
      %s76 = scalar_select %p73, %s74, %s75
      %p79 = pneg %p73
      %p80 = scmp.eq.s32.totalorder %s20, 1
      %p81 = por %p79, %p80
      %p82 = scmp.ne.s32.totalorder %s74, %s77
      %p83 = scmp.eq.s32.totalorder %s20, 0
      %p84 = por %p82, %p83
      %p85 = scmp.ne.s32.totalorder %s74, %s77
      %p86 = scmp.eq.s32.totalorder %s25, 1
      %p87 = por %p85, %p86
      %p88 = scmp.ne.s32.totalorder %s77, %s78
      %p89 = scmp.eq.s32.totalorder %s25, 0
      %p90 = por %p88, %p89
      %p91 = scmp.ne.s32.totalorder %s77, %s78
      %p92 = scmp.eq.s32.totalorder %s26, 1
      %p93 = por %p91, %p92
      %p95 = scmp.ne.s32.totalorder %s78, %s94
      %p96 = scmp.eq.s32.totalorder %s26, 0
      %p97 = por %p95, %p96
      %s99 = sadd.s32 %s98, 1
      %p102 = scmp.eq.s32.totalorder %s20, 1
      %p103 = scmp.ne.s32.totalorder %s98, %s100
      %p104 = scmp.eq.s32.totalorder %s20, 0
      %p105 = por %p103, %p104
      %p106 = scmp.ne.s32.totalorder %s98, %s100
      %p107 = scmp.eq.s32.totalorder %s25, 1
      %p108 = por %p106, %p107
      %p109 = scmp.ne.s32.totalorder %s100, %s101
      %p110 = scmp.eq.s32.totalorder %s25, 0
      %p111 = por %p109, %p110
      %p112 = scmp.ne.s32.totalorder %s100, %s101
      %p113 = scmp.eq.s32.totalorder %s26, 1
      %p114 = por %p112, %p113
      %p116 = scmp.ne.s32.totalorder %s101, %s115
      %p117 = scmp.eq.s32.totalorder %s26, 0
      %p118 = por %p116, %p117
      %s120 = sadd.s32 %s119, 1
      %p123 = scmp.eq.s32.totalorder %s20, 1
      %p124 = scmp.ne.s32.totalorder %s119, %s121
      %p125 = scmp.eq.s32.totalorder %s20, 0
      %p126 = por %p124, %p125
      %p127 = scmp.ne.s32.totalorder %s119, %s121
      %p128 = scmp.eq.s32.totalorder %s25, 1
      %p129 = por %p127, %p128
      %p130 = scmp.ne.s32.totalorder %s121, %s122
      %p131 = scmp.eq.s32.totalorder %s25, 0
      %p132 = por %p130, %p131
      %p133 = scmp.ne.s32.totalorder %s121, %s122
      %p134 = scmp.eq.s32.totalorder %s26, 1
      %p135 = por %p133, %p134
      %p137 = scmp.ne.s32.totalorder %s122, %s136
      %p138 = scmp.eq.s32.totalorder %s26, 0
      %p139 = por %p137, %p138
      %s141 = sadd.s32 %s140, 1
      %p144 = scmp.eq.s32.totalorder %s20, 1
      %p145 = scmp.ne.s32.totalorder %s140, %s142
      %p146 = scmp.eq.s32.totalorder %s20, 0
      %p147 = por %p145, %p146
      %p148 = scmp.ne.s32.totalorder %s140, %s142
      %p149 = scmp.eq.s32.totalorder %s25, 1
      %p150 = por %p148, %p149
      %p151 = scmp.ne.s32.totalorder %s142, %s143
      %p152 = scmp.eq.s32.totalorder %s25, 0
      %p153 = por %p151, %p152
      %p154 = scmp.ne.s32.totalorder %s142, %s143
      %p155 = scmp.eq.s32.totalorder %s26, 1
      %p156 = por %p154, %p155
      %p158 = scmp.ne.s32.totalorder %s143, %s157
      %p159 = scmp.eq.s32.totalorder %s26, 0
      %p160 = por %p158, %p159
      %s161 = ssub.s32 %s27, %s39
      %s162 = ssub.s32 %s28, %s35
      %s163 = sor.u32 %s161, %s162
      %p164 = scmp.eq.s32.totalorder %s163, 0
      %s166 = sadd.s32 %s165, 1
      %s167 = scalar_select %p164, %s165, %s166
      %p170 = pneg %p164
      %p171 = scmp.eq.s32.totalorder %s20, 1
      %p172 = por %p170, %p171
      %p173 = scmp.ne.s32.totalorder %s165, %s168
      %p174 = scmp.eq.s32.totalorder %s20, 0
      %p175 = por %p173, %p174
      %p176 = scmp.ne.s32.totalorder %s165, %s168
      %p177 = scmp.eq.s32.totalorder %s25, 1
      %p178 = por %p176, %p177
      %p179 = scmp.ne.s32.totalorder %s168, %s169
      %p180 = scmp.eq.s32.totalorder %s25, 0
      %p181 = por %p179, %p180
      %p182 = scmp.ne.s32.totalorder %s168, %s169
      %p183 = scmp.eq.s32.totalorder %s26, 1
      %p184 = por %p182, %p183
      %p186 = scmp.ne.s32.totalorder %s169, %s185
      %p187 = scmp.eq.s32.totalorder %s26, 0
      %p188 = por %p186, %p187
      %p189 = scmp.le.s32.totalorder 1, %s20
      %p190 = scmp.lt.s32.totalorder %s20, 3
      %p191 = pnand %p189, %p190
      %p192 = pneg %p191
      // Predicated region
      $region9: #{tpu_custom_call.1} parent=5 // pred_check
        _
      $region10: #{tpu_custom_call.1} parent=5 // pred_check_branch
        %194 = sbr.rel (%p191) target = $region12
      $region11: #{tpu_custom_call.1} parent=5 // pred_region
        %s195 = ssub.s32 %s20, 1
        // Predicated region
        $region13: #{tpu_custom_call.1} parent=11 // pred_check
          %p196 = pneg %p111
        $region14: #{tpu_custom_call.1} parent=11 // pred_check_branch
          %198 = sbr.rel (%p196) target = $region16
        $region15: #{tpu_custom_call.1} parent=11 // pred_region
          %s200 = ssub.s32 512, 512
          %201 = vsyncadd [#allocation7], %s200
          %s202 = sshll.u32 [#allocation8], 4
          %s203 = int_to_ptr.vmem [resolvable:$true] %s202
          %208 = dma.hbm_to_vmem [thread:$0]  %s2, 512, %s203, [#allocation7], 128, 128, 8
        $region16: #{tpu_custom_call.1} parent=11 // pred_fallthru
          _
        // Predicated region
        $region17: #{tpu_custom_call.1} parent=11 // pred_check
          %p209 = pneg %p132
        $region18: #{tpu_custom_call.1} parent=11 // pred_check_branch
          %211 = sbr.rel (%p209) target = $region20
        $region19: #{tpu_custom_call.1} parent=11 // pred_region
          _
        $region20: #{tpu_custom_call.1} parent=11 // pred_fallthru
          _
        // Predicated region
        $region21: #{tpu_custom_call.1} parent=11 // pred_check
          %p212 = pneg %p153
        $region22: #{tpu_custom_call.1} parent=11 // pred_check_branch
          %214 = sbr.rel (%p212) target = $region24
        $region23: #{tpu_custom_call.1} parent=11 // pred_region
          _
        $region24: #{tpu_custom_call.1} parent=11 // pred_fallthru
          _
      $region12: #{tpu_custom_call.1} parent=5 // pred_fallthru
        _
      %p215 = scmp.lt.s32.totalorder %s20, 2
      // Predicated region
      $region25: #{tpu_custom_call.1} parent=5 // pred_check
        %p216 = pneg %p215
      $region26: #{tpu_custom_call.1} parent=5 // pred_check_branch
        %218 = sbr.rel (%p216) target = $region28
      $region27: #{tpu_custom_call.1} parent=5 // pred_region
        // Predicated region
        $region29: #{tpu_custom_call.1} parent=27 // pred_check
          %p219 = pneg %p54
        $region30: #{tpu_custom_call.1} parent=27 // pred_check_branch
          %221 = sbr.rel (%p219) target = $region32
        $region31: #{tpu_custom_call.1} parent=27 // pred_region
          %s222 = sand.u32 %s44, 1
          %s223 = scalar_lea.sflag [#allocation4], %s222
          %s224 = sand.u32 %s44, 1
          %s225 = smul.addr %s224, 32
          %s226 = scalar_lea.vmem [#allocation3], %s225
          %s228 = ssub.s32 512, 512
          %229 = vsyncadd %s223, %s228
          %s230 = smul.addr %s27, 8
          %s231 = sadd.s32 %s28, %s230
          %s232 = smul.addr %s231, 128
          %s233 = scalar_lea.hbm %s0, %s232
          %s234 = sshll.u32 %s226, 4
          %s235 = int_to_ptr.vmem [resolvable:$true] %s234
          %240 = dma.hbm_to_vmem [thread:$0]  %s233, 512, %s235, %s223, 256, 128, 8
        $region32: #{tpu_custom_call.1} parent=27 // pred_fallthru
          _
        // Predicated region
        $region33: #{tpu_custom_call.1} parent=27 // pred_check
          %p241 = pneg %p84
        $region34: #{tpu_custom_call.1} parent=27 // pred_check_branch
          %243 = sbr.rel (%p241) target = $region36
        $region35: #{tpu_custom_call.1} parent=27 // pred_region
          %s244 = sand.u32 %s20, 1
          %s245 = scalar_lea.sflag [#allocation7], %s244
          %s246 = sand.u32 %s74, 1
          %s247 = smul.addr %s246, 32
          %s248 = scalar_lea.vmem [#allocation6], %s247
          %s249 = sadd.s32 %s28, 1
          %s251 = ssub.s32 512, 512
          %252 = vsyncadd %s245, %s251
          %s253 = smul.addr %s27, 8
          %s254 = sadd.s32 %s249, %s253
          %s255 = smul.addr %s254, 128
          %s256 = scalar_lea.hbm %s1, %s255
          %s257 = sshll.u32 %s248, 4
          %s258 = int_to_ptr.vmem [resolvable:$true] %s257
          %263 = dma.hbm_to_vmem [thread:$0]  %s256, 512, %s258, %s245, 256, 128, 8
        $region36: #{tpu_custom_call.1} parent=27 // pred_fallthru
          _
      $region28: #{tpu_custom_call.1} parent=5 // pred_fallthru
        _
      %p264 = scmp.le.s32.totalorder 1, %s20
      %p265 = scmp.lt.s32.totalorder %s20, 3
      %p266 = pnand %p264, %p265
      %p267 = pneg %p266
      // Predicated region
      $region37: #{tpu_custom_call.1} parent=5 // pred_check
        _
      $region38: #{tpu_custom_call.1} parent=5 // pred_check_branch
        %269 = sbr.rel (%p266) target = $region40
      $region39: #{tpu_custom_call.1} parent=5 // pred_region
        %s270 = ssub.s32 %s20, 1
        %s271 = sand.u32 %s47, 1
        %s272 = scalar_lea.sflag [#allocation4], %s271
        %s273 = sand.u32 %s47, 1
        %s274 = smul.addr %s273, 32
        %s275 = scalar_lea.vmem [#allocation3], %s274
        // Predicated region
        $region41: #{tpu_custom_call.1} parent=39 // pred_check
          %p276 = pneg %p60
        $region42: #{tpu_custom_call.1} parent=39 // pred_check_branch
          %278 = sbr.rel (%p276) target = $region44
        $region43: #{tpu_custom_call.1} parent=39 // pred_region
          %279 = dma.done %s272, 512
        $region44: #{tpu_custom_call.1} parent=39 // pred_fallthru
          _
        %s280 = sand.u32 %s25, 1
        %s281 = scalar_lea.sflag [#allocation7], %s280
        %s282 = sand.u32 %s77, 1
        %s283 = smul.addr %s282, 32
        %s284 = scalar_lea.vmem [#allocation6], %s283
        // Predicated region
        $region45: #{tpu_custom_call.1} parent=39 // pred_check
          %p285 = pneg %p90
        $region46: #{tpu_custom_call.1} parent=39 // pred_check_branch
          %287 = sbr.rel (%p285) target = $region48
        $region47: #{tpu_custom_call.1} parent=39 // pred_region
          %288 = dma.done %s281, 512
        $region48: #{tpu_custom_call.1} parent=39 // pred_fallthru
          _
        // Predicated region
        $region49: #{tpu_custom_call.1} parent=39 // pred_check
          %p289 = pneg %p111
        $region50: #{tpu_custom_call.1} parent=39 // pred_check_branch
          %291 = sbr.rel (%p289) target = $region52
        $region51: #{tpu_custom_call.1} parent=39 // pred_region
          %292 = dma.done [#allocation7], 512
        $region52: #{tpu_custom_call.1} parent=39 // pred_fallthru
          _
        %s293 = sand.u32 %s47, 1
        %s294 = scalar_lea.sflag [#allocation4], %s293
        %s295 = sand.u32 %s47, 1
        %s296 = smul.addr %s295, 32
        %s297 = scalar_lea.vmem [#allocation3], %s296
        %p298 = pneg %p60
        %p299 = pneg %p57
        %s300 = sand.u32 %s25, 1
        %s301 = scalar_lea.sflag [#allocation7], %s300
        %s302 = sand.u32 %s77, 1
        %s303 = smul.addr %s302, 32
        %s304 = scalar_lea.vmem [#allocation6], %s303
        %p305 = pneg %p90
        %p306 = pneg %p87
        %p307 = pneg %p111
        %p308 = pneg %p108
        %p309 = pneg %p132
        %p310 = pneg %p129
        %p311 = pneg %p153
        %p312 = pneg %p150
        %p313 = pneg %p181
        %p314 = pneg %p178
        %s315 = sand.u32 %s168, 1
        %s316 = scalar_lea.sflag [#allocation5], %s315
        %s317 = sand.u32 %s168, 1
        %s318 = smul.addr %s317, 64
        %s319 = scalar_lea.vmem [#allocation9], %s318
        %s320 = sadd.s32 %s30, 1
        %v321 = vld [vmem:[%s275] sm:$0xff]
        %v322 = vld [vmem:[%s275 + $0x8] sm:$0xff]
        %v323 = vld [vmem:[%s275 + $0x10] sm:$0xff]
        %v324 = vld [vmem:[%s275 + $0x18] sm:$0xff]
        %325 = vst [vmem:[#allocation2] sm:$0xff] %v321
        %326 = vst [vmem:[#allocation2 + $0x10] sm:$0xff] %v322
        %327 = vst [vmem:[#allocation2 + $0x20] sm:$0xff] %v323
        %328 = vst [vmem:[#allocation2 + $0x30] sm:$0xff] %v324
        %v329 = vld [vmem:[%s284] sm:$0x3]
        %v330 = vld [vmem:[%s284 + $0x8] sm:$0x3]
        %v331 = vld [vmem:[%s284 + $0x10] sm:$0x3]
        %v332 = vld [vmem:[%s284 + $0x18] sm:$0x3]
        %333 = vst [vmem:[#allocation2 + $0x8] sm:$0x3] %v329
        %334 = vst [vmem:[#allocation2 + $0x18] sm:$0x3] %v330
        %335 = vst [vmem:[#allocation2 + $0x28] sm:$0x3] %v331
        %336 = vst [vmem:[#allocation2 + $0x38] sm:$0x3] %v332
        %v337 = vld [vmem:[#allocation2 + $0x1] sm:$0xff]
        %v338 = vld [vmem:[#allocation2 + $0x11] sm:$0xff]
        %v339 = vld [vmem:[#allocation2 + $0x21] sm:$0xff]
        %v340 = vld [vmem:[#allocation2 + $0x31] sm:$0xff]
        %v341 = vld [vmem:[#allocation2 + $0x2] sm:$0xff]
        %v342 = vld [vmem:[#allocation2 + $0x12] sm:$0xff]
        %v343 = vld [vmem:[#allocation2 + $0x22] sm:$0xff]
        %v344 = vld [vmem:[#allocation2 + $0x32] sm:$0xff]
        %v345 = vld [vmem:[#allocation8] sm:$0xff]
        %v346 = vld [vmem:[#allocation8 + $0x8] sm:$0xff]
        %v347 = vld [vmem:[#allocation8 + $0x10] sm:$0xff]
        %v348 = vld [vmem:[#allocation8 + $0x18] sm:$0xff]
        %350 = vset.pattern.permute.xlu0 0
        %351 = vperm.xlu0 %350, %v345
        %v352 = vpop.permute.xlu0 %351
        %355 = vset.pattern.permute.xlu0 0
        %356 = vperm.xlu0 %355, %v346
        %v357 = vpop.permute.xlu0 %356
        %360 = vset.pattern.permute.xlu0 0
        %361 = vperm.xlu0 %360, %v347
        %v362 = vpop.permute.xlu0 %361
        %365 = vset.pattern.permute.xlu0 0
        %366 = vperm.xlu0 %365, %v348
        %v367 = vpop.permute.xlu0 %366
        %v369 = vmul.f32 %v352, %v321
        %v370 = vmul.f32 %v357, %v322
        %v371 = vmul.f32 %v362, %v323
        %v372 = vmul.f32 %v367, %v324
        %373 = vset.pattern.permute.xlu0 9
        %374 = vperm.xlu0 %373, %v345
        %v375 = vpop.permute.xlu0 %374
        %377 = vset.pattern.permute.xlu0 9
        %378 = vperm.xlu0 %377, %v346
        %v379 = vpop.permute.xlu0 %378
        %381 = vset.pattern.permute.xlu0 9
        %382 = vperm.xlu0 %381, %v347
        %v383 = vpop.permute.xlu0 %382
        %385 = vset.pattern.permute.xlu0 9
        %386 = vperm.xlu0 %385, %v348
        %v387 = vpop.permute.xlu0 %386
        %v389 = vmul.f32 %v375, %v337
        %v390 = vmul.f32 %v379, %v338
        %v391 = vmul.f32 %v383, %v339
        %v392 = vmul.f32 %v387, %v340
        %v393 = vadd.f32 %v369, %v389
        %v394 = vadd.f32 %v370, %v390
        %v395 = vadd.f32 %v371, %v391
        %v396 = vadd.f32 %v372, %v392
        %397 = vset.pattern.permute.xlu0 18
        %398 = vperm.xlu0 %397, %v345
        %v399 = vpop.permute.xlu0 %398
        %401 = vset.pattern.permute.xlu0 18
        %402 = vperm.xlu0 %401, %v346
        %v403 = vpop.permute.xlu0 %402
        %405 = vset.pattern.permute.xlu0 18
        %406 = vperm.xlu0 %405, %v347
        %v407 = vpop.permute.xlu0 %406
        %409 = vset.pattern.permute.xlu0 18
        %410 = vperm.xlu0 %409, %v348
        %v411 = vpop.permute.xlu0 %410
        %v413 = vmul.f32 %v399, %v341
        %v414 = vmul.f32 %v403, %v342
        %v415 = vmul.f32 %v407, %v343
        %v416 = vmul.f32 %v411, %v344
        %v417 = vadd.f32 %v393, %v413
        %v418 = vadd.f32 %v394, %v414
        %v419 = vadd.f32 %v395, %v415
        %v420 = vadd.f32 %v396, %v416
        %421 = vrot.lane.b32.xlu0 %v417, 11
        %v422 = vpop.permute.xlu0 %421
        %423 = vrot.lane.b32.xlu0 %v418, 11
        %v424 = vpop.permute.xlu0 %423
        %425 = vrot.lane.b32.xlu0 %v419, 11
        %v426 = vpop.permute.xlu0 %425
        %427 = vrot.lane.b32.xlu0 %v420, 11
        %v428 = vpop.permute.xlu0 %427
        %429 = vset.pattern.permute.xlu0 1
        %430 = vperm.xlu0 %429, %v345
        %v431 = vpop.permute.xlu0 %430
        %433 = vset.pattern.permute.xlu0 1
        %434 = vperm.xlu0 %433, %v346
        %v435 = vpop.permute.xlu0 %434
        %437 = vset.pattern.permute.xlu0 1
        %438 = vperm.xlu0 %437, %v347
        %v439 = vpop.permute.xlu0 %438
        %441 = vset.pattern.permute.xlu0 1
        %442 = vperm.xlu0 %441, %v348
        %v443 = vpop.permute.xlu0 %442
        %v445 = vmul.f32 %v431, %v321
        %v446 = vmul.f32 %v435, %v322
        %v447 = vmul.f32 %v439, %v323
        %v448 = vmul.f32 %v443, %v324
        %449 = vset.pattern.permute.xlu0 10
        %450 = vperm.xlu0 %449, %v345
        %v451 = vpop.permute.xlu0 %450
        %453 = vset.pattern.permute.xlu0 10
        %454 = vperm.xlu0 %453, %v346
        %v455 = vpop.permute.xlu0 %454
        %457 = vset.pattern.permute.xlu0 10
        %458 = vperm.xlu0 %457, %v347
        %v459 = vpop.permute.xlu0 %458
        %461 = vset.pattern.permute.xlu0 10
        %462 = vperm.xlu0 %461, %v348
        %v463 = vpop.permute.xlu0 %462
        %v465 = vmul.f32 %v451, %v337
        %v466 = vmul.f32 %v455, %v338
        %v467 = vmul.f32 %v459, %v339
        %v468 = vmul.f32 %v463, %v340
        %v469 = vadd.f32 %v445, %v465
        %v470 = vadd.f32 %v446, %v466
        %v471 = vadd.f32 %v447, %v467
        %v472 = vadd.f32 %v448, %v468
        %473 = vset.pattern.permute.xlu0 19
        %474 = vperm.xlu0 %473, %v345
        %v475 = vpop.permute.xlu0 %474
        %477 = vset.pattern.permute.xlu0 19
        %478 = vperm.xlu0 %477, %v346
        %v479 = vpop.permute.xlu0 %478
        %481 = vset.pattern.permute.xlu0 19
        %482 = vperm.xlu0 %481, %v347
        %v483 = vpop.permute.xlu0 %482
        %485 = vset.pattern.permute.xlu0 19
        %486 = vperm.xlu0 %485, %v348
        %v487 = vpop.permute.xlu0 %486
        %v489 = vmul.f32 %v475, %v341
        %v490 = vmul.f32 %v479, %v342
        %v491 = vmul.f32 %v483, %v343
        %v492 = vmul.f32 %v487, %v344
        %v493 = vadd.f32 %v469, %v489
        %v494 = vadd.f32 %v470, %v490
        %v495 = vadd.f32 %v471, %v491
        %v496 = vadd.f32 %v472, %v492
        %497 = vrot.lane.b32.xlu0 %v493, 10
        %v498 = vpop.permute.xlu0 %497
        %499 = vrot.lane.b32.xlu0 %v494, 10
        %v500 = vpop.permute.xlu0 %499
        %501 = vrot.lane.b32.xlu0 %v495, 10
        %v502 = vpop.permute.xlu0 %501
        %503 = vrot.lane.b32.xlu0 %v496, 10
        %v504 = vpop.permute.xlu0 %503
        %v505 = vadd.f32 %v422, %v498
        %v506 = vadd.f32 %v424, %v500
        %v507 = vadd.f32 %v426, %v502
        %v508 = vadd.f32 %v428, %v504
        %509 = vset.pattern.permute.xlu0 2
        %510 = vperm.xlu0 %509, %v345
        %v511 = vpop.permute.xlu0 %510
        %513 = vset.pattern.permute.xlu0 2
        %514 = vperm.xlu0 %513, %v346
        %v515 = vpop.permute.xlu0 %514
        %517 = vset.pattern.permute.xlu0 2
        %518 = vperm.xlu0 %517, %v347
        %v519 = vpop.permute.xlu0 %518
        %521 = vset.pattern.permute.xlu0 2
        %522 = vperm.xlu0 %521, %v348
        %v523 = vpop.permute.xlu0 %522
        %v525 = vmul.f32 %v511, %v321
        %v526 = vmul.f32 %v515, %v322
        %v527 = vmul.f32 %v519, %v323
        %v528 = vmul.f32 %v523, %v324
        %529 = vset.pattern.permute.xlu0 11
        %530 = vperm.xlu0 %529, %v345
        %v531 = vpop.permute.xlu0 %530
        %533 = vset.pattern.permute.xlu0 11
        %534 = vperm.xlu0 %533, %v346
        %v535 = vpop.permute.xlu0 %534
        %537 = vset.pattern.permute.xlu0 11
        %538 = vperm.xlu0 %537, %v347
        %v539 = vpop.permute.xlu0 %538
        %541 = vset.pattern.permute.xlu0 11
        %542 = vperm.xlu0 %541, %v348
        %v543 = vpop.permute.xlu0 %542
        %v545 = vmul.f32 %v531, %v337
        %v546 = vmul.f32 %v535, %v338
        %v547 = vmul.f32 %v539, %v339
        %v548 = vmul.f32 %v543, %v340
        %v549 = vadd.f32 %v525, %v545
        %v550 = vadd.f32 %v526, %v546
        %v551 = vadd.f32 %v527, %v547
        %v552 = vadd.f32 %v528, %v548
        %553 = vset.pattern.permute.xlu0 20
        %554 = vperm.xlu0 %553, %v345
        %v555 = vpop.permute.xlu0 %554
        %557 = vset.pattern.permute.xlu0 20
        %558 = vperm.xlu0 %557, %v346
        %v559 = vpop.permute.xlu0 %558
        %561 = vset.pattern.permute.xlu0 20
        %562 = vperm.xlu0 %561, %v347
        %v563 = vpop.permute.xlu0 %562
        %565 = vset.pattern.permute.xlu0 20
        %566 = vperm.xlu0 %565, %v348
        %v567 = vpop.permute.xlu0 %566
        %v569 = vmul.f32 %v555, %v341
        %v570 = vmul.f32 %v559, %v342
        %v571 = vmul.f32 %v563, %v343
        %v572 = vmul.f32 %v567, %v344
        %v573 = vadd.f32 %v549, %v569
        %v574 = vadd.f32 %v550, %v570
        %v575 = vadd.f32 %v551, %v571
        %v576 = vadd.f32 %v552, %v572
        %577 = vrot.lane.b32.xlu0 %v573, 9
        %v578 = vpop.permute.xlu0 %577
        %579 = vrot.lane.b32.xlu0 %v574, 9
        %v580 = vpop.permute.xlu0 %579
        %581 = vrot.lane.b32.xlu0 %v575, 9
        %v582 = vpop.permute.xlu0 %581
        %583 = vrot.lane.b32.xlu0 %v576, 9
        %v584 = vpop.permute.xlu0 %583
        %v585 = vadd.f32 %v505, %v578
        %v586 = vadd.f32 %v506, %v580
        %v587 = vadd.f32 %v507, %v582
        %v588 = vadd.f32 %v508, %v584
        %589 = vset.pattern.permute.xlu0 3
        %590 = vperm.xlu0 %589, %v345
        %v591 = vpop.permute.xlu0 %590
        %593 = vset.pattern.permute.xlu0 3
        %594 = vperm.xlu0 %593, %v346
        %v595 = vpop.permute.xlu0 %594
        %597 = vset.pattern.permute.xlu0 3
        %598 = vperm.xlu0 %597, %v347
        %v599 = vpop.permute.xlu0 %598
        %601 = vset.pattern.permute.xlu0 3
        %602 = vperm.xlu0 %601, %v348
        %v603 = vpop.permute.xlu0 %602
        %v605 = vmul.f32 %v591, %v321
        %v606 = vmul.f32 %v595, %v322
        %v607 = vmul.f32 %v599, %v323
        %v608 = vmul.f32 %v603, %v324
        %609 = vset.pattern.permute.xlu0 12
        %610 = vperm.xlu0 %609, %v345
        %v611 = vpop.permute.xlu0 %610
        %613 = vset.pattern.permute.xlu0 12
        %614 = vperm.xlu0 %613, %v346
        %v615 = vpop.permute.xlu0 %614
        %617 = vset.pattern.permute.xlu0 12
        %618 = vperm.xlu0 %617, %v347
        %v619 = vpop.permute.xlu0 %618
        %621 = vset.pattern.permute.xlu0 12
        %622 = vperm.xlu0 %621, %v348
        %v623 = vpop.permute.xlu0 %622
        %v625 = vmul.f32 %v611, %v337
        %v626 = vmul.f32 %v615, %v338
        %v627 = vmul.f32 %v619, %v339
        %v628 = vmul.f32 %v623, %v340
        %v629 = vadd.f32 %v605, %v625
        %v630 = vadd.f32 %v606, %v626
        %v631 = vadd.f32 %v607, %v627
        %v632 = vadd.f32 %v608, %v628
        %633 = vset.pattern.permute.xlu0 21
        %634 = vperm.xlu0 %633, %v345
        %v635 = vpop.permute.xlu0 %634
        %637 = vset.pattern.permute.xlu0 21
        %638 = vperm.xlu0 %637, %v346
        %v639 = vpop.permute.xlu0 %638
        %641 = vset.pattern.permute.xlu0 21
        %642 = vperm.xlu0 %641, %v347
        %v643 = vpop.permute.xlu0 %642
        %645 = vset.pattern.permute.xlu0 21
        %646 = vperm.xlu0 %645, %v348
        %v647 = vpop.permute.xlu0 %646
        %v649 = vmul.f32 %v635, %v341
        %v650 = vmul.f32 %v639, %v342
        %v651 = vmul.f32 %v643, %v343
        %v652 = vmul.f32 %v647, %v344
        %v653 = vadd.f32 %v629, %v649
        %v654 = vadd.f32 %v630, %v650
        %v655 = vadd.f32 %v631, %v651
        %v656 = vadd.f32 %v632, %v652
        %657 = vrot.lane.b32.xlu0 %v653, 1
        %v658 = vpop.permute.xlu0 %657
        %659 = vrot.lane.b32.xlu0 %v654, 1
        %v660 = vpop.permute.xlu0 %659
        %661 = vrot.lane.b32.xlu0 %v655, 1
        %v662 = vpop.permute.xlu0 %661
        %663 = vrot.lane.b32.xlu0 %v656, 1
        %v664 = vpop.permute.xlu0 %663
        %v665 = vadd.f32 %v585, %v658
        %v666 = vadd.f32 %v586, %v660
        %v667 = vadd.f32 %v587, %v662
        %v668 = vadd.f32 %v588, %v664
        %669 = vset.pattern.permute.xlu0 4
        %670 = vperm.xlu0 %669, %v345
        %v671 = vpop.permute.xlu0 %670
        %673 = vset.pattern.permute.xlu0 4
        %674 = vperm.xlu0 %673, %v346
        %v675 = vpop.permute.xlu0 %674
        %677 = vset.pattern.permute.xlu0 4
        %678 = vperm.xlu0 %677, %v347
        %v679 = vpop.permute.xlu0 %678
        %681 = vset.pattern.permute.xlu0 4
        %682 = vperm.xlu0 %681, %v348
        %v683 = vpop.permute.xlu0 %682
        %v685 = vmul.f32 %v671, %v321
        %v686 = vmul.f32 %v675, %v322
        %v687 = vmul.f32 %v679, %v323
        %v688 = vmul.f32 %v683, %v324
        %689 = vset.pattern.permute.xlu0 13
        %690 = vperm.xlu0 %689, %v345
        %v691 = vpop.permute.xlu0 %690
        %693 = vset.pattern.permute.xlu0 13
        %694 = vperm.xlu0 %693, %v346
        %v695 = vpop.permute.xlu0 %694
        %697 = vset.pattern.permute.xlu0 13
        %698 = vperm.xlu0 %697, %v347
        %v699 = vpop.permute.xlu0 %698
        %701 = vset.pattern.permute.xlu0 13
        %702 = vperm.xlu0 %701, %v348
        %v703 = vpop.permute.xlu0 %702
        %v705 = vmul.f32 %v691, %v337
        %v706 = vmul.f32 %v695, %v338
        %v707 = vmul.f32 %v699, %v339
        %v708 = vmul.f32 %v703, %v340
        %v709 = vadd.f32 %v685, %v705
        %v710 = vadd.f32 %v686, %v706
        %v711 = vadd.f32 %v687, %v707
        %v712 = vadd.f32 %v688, %v708
        %713 = vset.pattern.permute.xlu0 22
        %714 = vperm.xlu0 %713, %v345
        %v715 = vpop.permute.xlu0 %714
        %717 = vset.pattern.permute.xlu0 22
        %718 = vperm.xlu0 %717, %v346
        %v719 = vpop.permute.xlu0 %718
        %721 = vset.pattern.permute.xlu0 22
        %722 = vperm.xlu0 %721, %v347
        %v723 = vpop.permute.xlu0 %722
        %725 = vset.pattern.permute.xlu0 22
        %726 = vperm.xlu0 %725, %v348
        %v727 = vpop.permute.xlu0 %726
        %v729 = vmul.f32 %v715, %v341
        %v730 = vmul.f32 %v719, %v342
        %v731 = vmul.f32 %v723, %v343
        %v732 = vmul.f32 %v727, %v344
        %v733 = vadd.f32 %v709, %v729
        %v734 = vadd.f32 %v710, %v730
        %v735 = vadd.f32 %v711, %v731
        %v736 = vadd.f32 %v712, %v732
        %v737 = vadd.f32 %v665, %v733
        %v738 = vadd.f32 %v666, %v734
        %v739 = vadd.f32 %v667, %v735
        %v740 = vadd.f32 %v668, %v736
        %741 = vset.pattern.permute.xlu0 5
        %742 = vperm.xlu0 %741, %v345
        %v743 = vpop.permute.xlu0 %742
        %745 = vset.pattern.permute.xlu0 5
        %746 = vperm.xlu0 %745, %v346
        %v747 = vpop.permute.xlu0 %746
        %749 = vset.pattern.permute.xlu0 5
        %750 = vperm.xlu0 %749, %v347
        %v751 = vpop.permute.xlu0 %750
        %753 = vset.pattern.permute.xlu0 5
        %754 = vperm.xlu0 %753, %v348
        %v755 = vpop.permute.xlu0 %754
        %v757 = vmul.f32 %v743, %v321
        %v758 = vmul.f32 %v747, %v322
        %v759 = vmul.f32 %v751, %v323
        %v760 = vmul.f32 %v755, %v324
        %761 = vset.pattern.permute.xlu0 14
        %762 = vperm.xlu0 %761, %v345
        %v763 = vpop.permute.xlu0 %762
        %765 = vset.pattern.permute.xlu0 14
        %766 = vperm.xlu0 %765, %v346
        %v767 = vpop.permute.xlu0 %766
        %769 = vset.pattern.permute.xlu0 14
        %770 = vperm.xlu0 %769, %v347
        %v771 = vpop.permute.xlu0 %770
        %773 = vset.pattern.permute.xlu0 14
        %774 = vperm.xlu0 %773, %v348
        %v775 = vpop.permute.xlu0 %774
        %v777 = vmul.f32 %v763, %v337
        %v778 = vmul.f32 %v767, %v338
        %v779 = vmul.f32 %v771, %v339
        %v780 = vmul.f32 %v775, %v340
        %v781 = vadd.f32 %v757, %v777
        %v782 = vadd.f32 %v758, %v778
        %v783 = vadd.f32 %v759, %v779
        %v784 = vadd.f32 %v760, %v780
        %785 = vset.pattern.permute.xlu0 23
        %786 = vperm.xlu0 %785, %v345
        %v787 = vpop.permute.xlu0 %786
        %789 = vset.pattern.permute.xlu0 23
        %790 = vperm.xlu0 %789, %v346
        %v791 = vpop.permute.xlu0 %790
        %793 = vset.pattern.permute.xlu0 23
        %794 = vperm.xlu0 %793, %v347
        %v795 = vpop.permute.xlu0 %794
        %797 = vset.pattern.permute.xlu0 23
        %798 = vperm.xlu0 %797, %v348
        %v799 = vpop.permute.xlu0 %798
        %v801 = vmul.f32 %v787, %v341
        %v802 = vmul.f32 %v791, %v342
        %v803 = vmul.f32 %v795, %v343
        %v804 = vmul.f32 %v799, %v344
        %v805 = vadd.f32 %v781, %v801
        %v806 = vadd.f32 %v782, %v802
        %v807 = vadd.f32 %v783, %v803
        %v808 = vadd.f32 %v784, %v804
        %809 = vrot.lane.b32.xlu0 %v805, 127
        %v810 = vpop.permute.xlu0 %809
        %811 = vrot.lane.b32.xlu0 %v806, 127
        %v812 = vpop.permute.xlu0 %811
        %813 = vrot.lane.b32.xlu0 %v807, 127
        %v814 = vpop.permute.xlu0 %813
        %815 = vrot.lane.b32.xlu0 %v808, 127
        %v816 = vpop.permute.xlu0 %815
        %v817 = vadd.f32 %v737, %v810
        %v818 = vadd.f32 %v738, %v812
        %v819 = vadd.f32 %v739, %v814
        %v820 = vadd.f32 %v740, %v816
        %821 = vset.pattern.permute.xlu0 6
        %822 = vperm.xlu0 %821, %v345
        %v823 = vpop.permute.xlu0 %822
        %825 = vset.pattern.permute.xlu0 6
        %826 = vperm.xlu0 %825, %v346
        %v827 = vpop.permute.xlu0 %826
        %829 = vset.pattern.permute.xlu0 6
        %830 = vperm.xlu0 %829, %v347
        %v831 = vpop.permute.xlu0 %830
        %833 = vset.pattern.permute.xlu0 6
        %834 = vperm.xlu0 %833, %v348
        %v835 = vpop.permute.xlu0 %834
        %v837 = vmul.f32 %v823, %v321
        %v838 = vmul.f32 %v827, %v322
        %v839 = vmul.f32 %v831, %v323
        %v840 = vmul.f32 %v835, %v324
        %841 = vset.pattern.permute.xlu0 15
        %842 = vperm.xlu0 %841, %v345
        %v843 = vpop.permute.xlu0 %842
        %845 = vset.pattern.permute.xlu0 15
        %846 = vperm.xlu0 %845, %v346
        %v847 = vpop.permute.xlu0 %846
        %849 = vset.pattern.permute.xlu0 15
        %850 = vperm.xlu0 %849, %v347
        %v851 = vpop.permute.xlu0 %850
        %853 = vset.pattern.permute.xlu0 15
        %854 = vperm.xlu0 %853, %v348
        %v855 = vpop.permute.xlu0 %854
        %v857 = vmul.f32 %v843, %v337
        %v858 = vmul.f32 %v847, %v338
        %v859 = vmul.f32 %v851, %v339
        %v860 = vmul.f32 %v855, %v340
        %v861 = vadd.f32 %v837, %v857
        %v862 = vadd.f32 %v838, %v858
        %v863 = vadd.f32 %v839, %v859
        %v864 = vadd.f32 %v840, %v860
        %865 = vset.pattern.permute.xlu0 24
        %866 = vperm.xlu0 %865, %v345
        %v867 = vpop.permute.xlu0 %866
        %869 = vset.pattern.permute.xlu0 24
        %870 = vperm.xlu0 %869, %v346
        %v871 = vpop.permute.xlu0 %870
        %873 = vset.pattern.permute.xlu0 24
        %874 = vperm.xlu0 %873, %v347
        %v875 = vpop.permute.xlu0 %874
        %877 = vset.pattern.permute.xlu0 24
        %878 = vperm.xlu0 %877, %v348
        %v879 = vpop.permute.xlu0 %878
        %v881 = vmul.f32 %v867, %v341
        %v882 = vmul.f32 %v871, %v342
        %v883 = vmul.f32 %v875, %v343
        %v884 = vmul.f32 %v879, %v344
        %v885 = vadd.f32 %v861, %v881
        %v886 = vadd.f32 %v862, %v882
        %v887 = vadd.f32 %v863, %v883
        %v888 = vadd.f32 %v864, %v884
        %889 = vrot.lane.b32.xlu0 %v885, 119
        %v890 = vpop.permute.xlu0 %889
        %891 = vrot.lane.b32.xlu0 %v886, 119
        %v892 = vpop.permute.xlu0 %891
        %893 = vrot.lane.b32.xlu0 %v887, 119
        %v894 = vpop.permute.xlu0 %893
        %895 = vrot.lane.b32.xlu0 %v888, 119
        %v896 = vpop.permute.xlu0 %895
        %v897 = vadd.f32 %v817, %v890
        %v898 = vadd.f32 %v818, %v892
        %v899 = vadd.f32 %v819, %v894
        %v900 = vadd.f32 %v820, %v896
        %901 = vset.pattern.permute.xlu0 7
        %902 = vperm.xlu0 %901, %v345
        %v903 = vpop.permute.xlu0 %902
        %905 = vset.pattern.permute.xlu0 7
        %906 = vperm.xlu0 %905, %v346
        %v907 = vpop.permute.xlu0 %906
        %909 = vset.pattern.permute.xlu0 7
        %910 = vperm.xlu0 %909, %v347
        %v911 = vpop.permute.xlu0 %910
        %913 = vset.pattern.permute.xlu0 7
        %914 = vperm.xlu0 %913, %v348
        %v915 = vpop.permute.xlu0 %914
        %v917 = vmul.f32 %v903, %v321
        %v918 = vmul.f32 %v907, %v322
        %v919 = vmul.f32 %v911, %v323
        %v920 = vmul.f32 %v915, %v324
        %921 = vset.pattern.permute.xlu0 16
        %922 = vperm.xlu0 %921, %v345
        %v923 = vpop.permute.xlu0 %922
        %925 = vset.pattern.permute.xlu0 16
        %926 = vperm.xlu0 %925, %v346
        %v927 = vpop.permute.xlu0 %926
        %929 = vset.pattern.permute.xlu0 16
        %930 = vperm.xlu0 %929, %v347
        %v931 = vpop.permute.xlu0 %930
        %933 = vset.pattern.permute.xlu0 16
        %934 = vperm.xlu0 %933, %v348
        %v935 = vpop.permute.xlu0 %934
        %v937 = vmul.f32 %v923, %v337
        %v938 = vmul.f32 %v927, %v338
        %v939 = vmul.f32 %v931, %v339
        %v940 = vmul.f32 %v935, %v340
        %v941 = vadd.f32 %v917, %v937
        %v942 = vadd.f32 %v918, %v938
        %v943 = vadd.f32 %v919, %v939
        %v944 = vadd.f32 %v920, %v940
        %945 = vset.pattern.permute.xlu0 25
        %946 = vperm.xlu0 %945, %v345
        %v947 = vpop.permute.xlu0 %946
        %949 = vset.pattern.permute.xlu0 25
        %950 = vperm.xlu0 %949, %v346
        %v951 = vpop.permute.xlu0 %950
        %953 = vset.pattern.permute.xlu0 25
        %954 = vperm.xlu0 %953, %v347
        %v955 = vpop.permute.xlu0 %954
        %957 = vset.pattern.permute.xlu0 25
        %958 = vperm.xlu0 %957, %v348
        %v959 = vpop.permute.xlu0 %958
        %v961 = vmul.f32 %v947, %v341
        %v962 = vmul.f32 %v951, %v342
        %v963 = vmul.f32 %v955, %v343
        %v964 = vmul.f32 %v959, %v344
        %v965 = vadd.f32 %v941, %v961
        %v966 = vadd.f32 %v942, %v962
        %v967 = vadd.f32 %v943, %v963
        %v968 = vadd.f32 %v944, %v964
        %969 = vrot.lane.b32.xlu0 %v965, 118
        %v970 = vpop.permute.xlu0 %969
        %971 = vrot.lane.b32.xlu0 %v966, 118
        %v972 = vpop.permute.xlu0 %971
        %973 = vrot.lane.b32.xlu0 %v967, 118
        %v974 = vpop.permute.xlu0 %973
        %975 = vrot.lane.b32.xlu0 %v968, 118
        %v976 = vpop.permute.xlu0 %975
        %v977 = vadd.f32 %v897, %v970
        %v978 = vadd.f32 %v898, %v972
        %v979 = vadd.f32 %v899, %v974
        %v980 = vadd.f32 %v900, %v976
        %981 = vset.pattern.permute.xlu0 8
        %982 = vperm.xlu0 %981, %v345
        %v983 = vpop.permute.xlu0 %982
        %985 = vset.pattern.permute.xlu0 8
        %986 = vperm.xlu0 %985, %v346
        %v987 = vpop.permute.xlu0 %986
        %989 = vset.pattern.permute.xlu0 8
        %990 = vperm.xlu0 %989, %v347
        %v991 = vpop.permute.xlu0 %990
        %993 = vset.pattern.permute.xlu0 8
        %994 = vperm.xlu0 %993, %v348
        %v995 = vpop.permute.xlu0 %994
        %v997 = vmul.f32 %v983, %v321
        %v998 = vmul.f32 %v987, %v322
        %v999 = vmul.f32 %v991, %v323
        %v1000 = vmul.f32 %v995, %v324
        %1001 = vset.pattern.permute.xlu0 17
        %1002 = vperm.xlu0 %1001, %v345
        %v1003 = vpop.permute.xlu0 %1002
        %1005 = vset.pattern.permute.xlu0 17
        %1006 = vperm.xlu0 %1005, %v346
        %v1007 = vpop.permute.xlu0 %1006
        %1009 = vset.pattern.permute.xlu0 17
        %1010 = vperm.xlu0 %1009, %v347
        %v1011 = vpop.permute.xlu0 %1010
        %1013 = vset.pattern.permute.xlu0 17
        %1014 = vperm.xlu0 %1013, %v348
        %v1015 = vpop.permute.xlu0 %1014
        %v1017 = vmul.f32 %v1003, %v337
        %v1018 = vmul.f32 %v1007, %v338
        %v1019 = vmul.f32 %v1011, %v339
        %v1020 = vmul.f32 %v1015, %v340
        %v1021 = vadd.f32 %v997, %v1017
        %v1022 = vadd.f32 %v998, %v1018
        %v1023 = vadd.f32 %v999, %v1019
        %v1024 = vadd.f32 %v1000, %v1020
        %1025 = vset.pattern.permute.xlu0 26
        %1026 = vperm.xlu0 %1025, %v345
        %v1027 = vpop.permute.xlu0 %1026
        %1029 = vset.pattern.permute.xlu0 26
        %1030 = vperm.xlu0 %1029, %v346
        %v1031 = vpop.permute.xlu0 %1030
        %1033 = vset.pattern.permute.xlu0 26
        %1034 = vperm.xlu0 %1033, %v347
        %v1035 = vpop.permute.xlu0 %1034
        %1037 = vset.pattern.permute.xlu0 26
        %1038 = vperm.xlu0 %1037, %v348
        %v1039 = vpop.permute.xlu0 %1038
        %v1041 = vmul.f32 %v1027, %v341
        %v1042 = vmul.f32 %v1031, %v342
        %v1043 = vmul.f32 %v1035, %v343
        %v1044 = vmul.f32 %v1039, %v344
        %v1045 = vadd.f32 %v1021, %v1041
        %v1046 = vadd.f32 %v1022, %v1042
        %v1047 = vadd.f32 %v1023, %v1043
        %v1048 = vadd.f32 %v1024, %v1044
        %1049 = vrot.lane.b32.xlu0 %v1045, 117
        %v1050 = vpop.permute.xlu0 %1049
        %1051 = vrot.lane.b32.xlu0 %v1046, 117
        %v1052 = vpop.permute.xlu0 %1051
        %1053 = vrot.lane.b32.xlu0 %v1047, 117
        %v1054 = vpop.permute.xlu0 %1053
        %1055 = vrot.lane.b32.xlu0 %v1048, 117
        %v1056 = vpop.permute.xlu0 %1055
        %v1057 = vadd.f32 %v977, %v1050
        %v1058 = vadd.f32 %v978, %v1052
        %v1059 = vadd.f32 %v979, %v1054
        %v1060 = vadd.f32 %v980, %v1056
        %v1061 = vld [vmem:[%s3] sm:$0xff]
        %v1062 = vld [vmem:[%s4] sm:$0xff]
        %1064 = vset.pattern.permute.xlu0 0
        %1065 = vperm.xlu0 %1064, %v1062
        %v1066 = vpop.permute.xlu0 %1065
        %v1072 = vrot.slane %v1058, 7
        %vm1073 = vcmask 1041409
        %v1074 = vsel %vm1073, %v1072, %v1057
        %v1075 = vrot.slane %v1059, 6
        %vm1076 = vcmask 1042434
        %v1077 = vsel %vm1076, %v1075, %v1074
        %v1078 = vrot.slane %v1060, 5
        %vm1079 = vcmask 1043459
        %v1080 = vsel %vm1079, %v1078, %v1077
        %vm1081 = vcmask 31744
        %v1083 = vsel %vm1081, %v1061, 0
        %vm1085 = vcmask 1043456
        %v1086 = vsel %vm1085, %v1080, 0
        %1088 = vmatprep.subr.mxu0 0.0
        %1089 = vmatpush1.msra.mxu0 0.0
        %1090 = vmatprep.subr.mxu0 0.0
        %1091 = vmatpush1.msra.mxu0 0.0
        %1092 = vmatprep.subr.mxu0 0.0
        %1093 = vmatpush1.msra.mxu0 0.0
        %1094 = vmatprep.subr.mxu0 0.0
        %1095 = vmatpush1.msra.mxu0 0.0
        %1096 = vmatprep.subr.mxu0 0.0
        %1097 = vmatpush1.msra.mxu0 0.0
        %1098 = vmatprep.subr.mxu0 0.0
        %1099 = vmatpush1.msra.mxu0 0.0
        %1100 = vmatprep.subr.mxu0 0.0
        %1101 = vmatpush1.msra.mxu0 0.0
        %1102 = vmatprep.subr.mxu0 0.0
        %1103 = vmatpush1.msra.mxu0 0.0
        %1104 = vmatprep.subr.mxu0 0.0
        %1105 = vmatpush1.msra.mxu0 0.0
        %1106 = vmatprep.subr.mxu0 0.0
        %1107 = vmatpush1.msra.mxu0 0.0
        %1108 = vmatprep.subr.mxu0 0.0
        %1109 = vmatpush1.msra.mxu0 0.0
        %1110 = vmatprep.subr.mxu0 0.0
        %1111 = vmatpush1.msra.mxu0 0.0
        %1112 = vmatprep.subr.mxu0 0.0
        %1113 = vmatpush1.msra.mxu0 0.0
        %1114 = vmatprep.subr.mxu0 0.0
        %1115 = vmatpush1.msra.mxu0 0.0
        %1116 = vmatprep.subr.mxu0 0.0
        %1117 = vmatpush1.msra.mxu0 0.0
        %1118 = vmatprep.subr.mxu0 0.0
        %1119 = vmatpush1.msra.mxu0 %v1086
        %1120 = vmatprep.subr.mxu0 0.0
        %1121 = vmatpush2.msra.mxu0 0.0
        %1122 = vmatprep.subr.mxu0 0.0
        %1123 = vmatpush2.msra.mxu0 0.0
        %1124 = vmatprep.subr.mxu0 0.0
        %1125 = vmatpush2.msra.mxu0 0.0
        %1126 = vmatprep.subr.mxu0 0.0
        %1127 = vmatpush2.msra.mxu0 0.0
        %1128 = vmatprep.subr.mxu0 0.0
        %1129 = vmatpush2.msra.mxu0 0.0
        %1130 = vmatprep.subr.mxu0 0.0
        %1131 = vmatpush2.msra.mxu0 0.0
        %1132 = vmatprep.subr.mxu0 0.0
        %1133 = vmatpush2.msra.mxu0 0.0
        %1134 = vmatprep.subr.mxu0 0.0
        %1135 = vmatpush2.msra.mxu0 0.0
        %1136 = vmatprep.subr.mxu0 0.0
        %1137 = vmatpush2.msra.mxu0 0.0
        %1138 = vmatprep.subr.mxu0 0.0
        %1139 = vmatpush2.msra.mxu0 0.0
        %1140 = vmatprep.subr.mxu0 0.0
        %1141 = vmatpush2.msra.mxu0 0.0
        %1142 = vmatprep.subr.mxu0 0.0
        %1143 = vmatpush2.msra.mxu0 0.0
        %1144 = vmatprep.subr.mxu0 0.0
        %1145 = vmatpush2.msra.mxu0 0.0
        %1146 = vmatprep.subr.mxu0 0.0
        %1147 = vmatpush2.msra.mxu0 0.0
        %1148 = vmatprep.subr.mxu0 0.0
        %1149 = vmatpush2.msra.mxu0 0.0
        %1150 = vmatprep.subr.mxu0 0.0
        %1151 = vmatpush2.msra.mxu0 0.0
        %1152 = vmatprep.mubr.f32.mxu0 0.0
        %1153 = vmatmul.mubr.f32.gmra.mxu0 %v1083
        %v1154 = vpop.f32.mrf.mxu0
        %v1155 = vadd.f32 %v1066, %v1154
        %v1156 = vpop.f32.mrf.mxu0
        %1157 = vdwg.mxu0
        %v1159 = vcombine.high %v1155, %v1155
        %v1161 = vunpack.c.l.s4 1966171168
        %v1162 = vunpack.c.0.s8 %v1161
        %v1163 = vlaneseq
        %v1164 = vshrl.u32 %v1163, 7
        %v1165 = vsub.s32 %v1162, %v1164
        %v1166 = vrot.slane %v1155, %v1165
        %v1168 = vunpack.c.l.s4 1966171168
        %v1169 = vunpack.c.0.s8 %v1168
        %v1170 = vlaneseq
        %v1171 = vshrl.u32 %v1170, 7
        %v1172 = vsub.s32 %v1169, %v1171
        %v1173 = vrot.slane %v1159, %v1172
        %v1174 = vcombine.high %v1166, %v1166
        %v1175 = vcombine.high %v1173, %v1173
        %v1177 = vunpack.c.l.s4 1966171168
        %v1178 = vunpack.c.0.s8 %v1177
        %v1179 = vlaneseq
        %v1180 = vshrl.u32 %v1179, 7
        %v1181 = vsub.s32 %v1178, %v1180
        %v1182 = vrot.slane %v1166, %v1181
        %v1184 = vunpack.c.l.s4 1966171168
        %v1185 = vunpack.c.0.s8 %v1184
        %v1186 = vlaneseq
        %v1187 = vshrl.u32 %v1186, 7
        %v1188 = vsub.s32 %v1185, %v1187
        %v1189 = vrot.slane %v1173, %v1188
        %v1191 = vunpack.c.l.s4 1966171168
        %v1192 = vunpack.c.0.s8 %v1191
        %v1193 = vlaneseq
        %v1194 = vshrl.u32 %v1193, 7
        %v1195 = vsub.s32 %v1192, %v1194
        %v1196 = vrot.slane %v1174, %v1195
        %v1198 = vunpack.c.l.s4 1966171168
        %v1199 = vunpack.c.0.s8 %v1198
        %v1200 = vlaneseq
        %v1201 = vshrl.u32 %v1200, 7
        %v1202 = vsub.s32 %v1199, %v1201
        %v1203 = vrot.slane %v1175, %v1202
        %v1204 = vcombine.high %v1182, %v1182
        %v1205 = vcombine.high %v1189, %v1189
        %v1206 = vcombine.high %v1196, %v1196
        %v1207 = vcombine.high %v1203, %v1203
        %1216 = vst [vmem:[%s319] sm:$0x1] %v1182
        %1217 = vst [vmem:[%s319 + $0x8] sm:$0x1] %v1196
        %1218 = vst [vmem:[%s319 + $0x10] sm:$0x1] %v1204
        %1219 = vst [vmem:[%s319 + $0x18] sm:$0x1] %v1206
        %1220 = vst [vmem:[%s319 + $0x20] sm:$0x1] %v1189
        %1221 = vst [vmem:[%s319 + $0x28] sm:$0x1] %v1203
        %1222 = vst [vmem:[%s319 + $0x30] sm:$0x1] %v1205
        %1223 = vst [vmem:[%s319 + $0x38] sm:$0x1] %v1207
        %v1224 = vrot.slane %v1057, 1
        %v1225 = vsel %vm1073, %v1058, %v1224
        %v1226 = vrot.slane %v1059, 7
        %v1227 = vsel %vm1076, %v1226, %v1225
        %v1228 = vrot.slane %v1060, 6
        %v1229 = vsel %vm1079, %v1228, %v1227
        %v1230 = vsel %vm1085, %v1229, 0
        %1232 = vmatprep.subr.mxu0 0.0
        %1233 = vmatpush1.msra.mxu0 0.0
        %1234 = vmatprep.subr.mxu0 0.0
        %1235 = vmatpush1.msra.mxu0 0.0
        %1236 = vmatprep.subr.mxu0 0.0
        %1237 = vmatpush1.msra.mxu0 0.0
        %1238 = vmatprep.subr.mxu0 0.0
        %1239 = vmatpush1.msra.mxu0 0.0
        %1240 = vmatprep.subr.mxu0 0.0
        %1241 = vmatpush1.msra.mxu0 0.0
        %1242 = vmatprep.subr.mxu0 0.0
        %1243 = vmatpush1.msra.mxu0 0.0
        %1244 = vmatprep.subr.mxu0 0.0
        %1245 = vmatpush1.msra.mxu0 0.0
        %1246 = vmatprep.subr.mxu0 0.0
        %1247 = vmatpush1.msra.mxu0 0.0
        %1248 = vmatprep.subr.mxu0 0.0
        %1249 = vmatpush1.msra.mxu0 0.0
        %1250 = vmatprep.subr.mxu0 0.0
        %1251 = vmatpush1.msra.mxu0 0.0
        %1252 = vmatprep.subr.mxu0 0.0
        %1253 = vmatpush1.msra.mxu0 0.0
        %1254 = vmatprep.subr.mxu0 0.0
        %1255 = vmatpush1.msra.mxu0 0.0
        %1256 = vmatprep.subr.mxu0 0.0
        %1257 = vmatpush1.msra.mxu0 0.0
        %1258 = vmatprep.subr.mxu0 0.0
        %1259 = vmatpush1.msra.mxu0 0.0
        %1260 = vmatprep.subr.mxu0 0.0
        %1261 = vmatpush1.msra.mxu0 0.0
        %1262 = vmatprep.subr.mxu0 0.0
        %1263 = vmatpush1.msra.mxu0 %v1230
        %1264 = vmatprep.subr.mxu0 0.0
        %1265 = vmatpush2.msra.mxu0 0.0
        %1266 = vmatprep.subr.mxu0 0.0
        %1267 = vmatpush2.msra.mxu0 0.0
        %1268 = vmatprep.subr.mxu0 0.0
        %1269 = vmatpush2.msra.mxu0 0.0
        %1270 = vmatprep.subr.mxu0 0.0
        %1271 = vmatpush2.msra.mxu0 0.0
        %1272 = vmatprep.subr.mxu0 0.0
        %1273 = vmatpush2.msra.mxu0 0.0
        %1274 = vmatprep.subr.mxu0 0.0
        %1275 = vmatpush2.msra.mxu0 0.0
        %1276 = vmatprep.subr.mxu0 0.0
        %1277 = vmatpush2.msra.mxu0 0.0
        %1278 = vmatprep.subr.mxu0 0.0
        %1279 = vmatpush2.msra.mxu0 0.0
        %1280 = vmatprep.subr.mxu0 0.0
        %1281 = vmatpush2.msra.mxu0 0.0
        %1282 = vmatprep.subr.mxu0 0.0
        %1283 = vmatpush2.msra.mxu0 0.0
        %1284 = vmatprep.subr.mxu0 0.0
        %1285 = vmatpush2.msra.mxu0 0.0
        %1286 = vmatprep.subr.mxu0 0.0
        %1287 = vmatpush2.msra.mxu0 0.0
        %1288 = vmatprep.subr.mxu0 0.0
        %1289 = vmatpush2.msra.mxu0 0.0
        %1290 = vmatprep.subr.mxu0 0.0
        %1291 = vmatpush2.msra.mxu0 0.0
        %1292 = vmatprep.subr.mxu0 0.0
        %1293 = vmatpush2.msra.mxu0 0.0
        %1294 = vmatprep.subr.mxu0 0.0
        %1295 = vmatpush2.msra.mxu0 0.0
        %1296 = vmatprep.mubr.f32.mxu0 0.0
        %1297 = vmatmul.mubr.f32.gmra.mxu0 %v1083
        %v1298 = vpop.f32.mrf.mxu0
        %v1299 = vadd.f32 %v1066, %v1298
        %v1300 = vpop.f32.mrf.mxu0
        %1301 = vdwg.mxu0
        %v1303 = vcombine.high %v1299, %v1299
        %v1305 = vunpack.c.l.s4 1966171168
        %v1306 = vunpack.c.0.s8 %v1305
        %v1307 = vlaneseq
        %v1308 = vshrl.u32 %v1307, 7
        %v1309 = vsub.s32 %v1306, %v1308
        %v1310 = vrot.slane %v1299, %v1309
        %v1312 = vunpack.c.l.s4 1966171168
        %v1313 = vunpack.c.0.s8 %v1312
        %v1314 = vlaneseq
        %v1315 = vshrl.u32 %v1314, 7
        %v1316 = vsub.s32 %v1313, %v1315
        %v1317 = vrot.slane %v1303, %v1316
        %v1318 = vcombine.high %v1310, %v1310
        %v1319 = vcombine.high %v1317, %v1317
        %v1321 = vunpack.c.l.s4 1966171168
        %v1322 = vunpack.c.0.s8 %v1321
        %v1323 = vlaneseq
        %v1324 = vshrl.u32 %v1323, 7
        %v1325 = vsub.s32 %v1322, %v1324
        %v1326 = vrot.slane %v1310, %v1325
        %v1328 = vunpack.c.l.s4 1966171168
        %v1329 = vunpack.c.0.s8 %v1328
        %v1330 = vlaneseq
        %v1331 = vshrl.u32 %v1330, 7
        %v1332 = vsub.s32 %v1329, %v1331
        %v1333 = vrot.slane %v1317, %v1332
        %v1335 = vunpack.c.l.s4 1966171168
        %v1336 = vunpack.c.0.s8 %v1335
        %v1337 = vlaneseq
        %v1338 = vshrl.u32 %v1337, 7
        %v1339 = vsub.s32 %v1336, %v1338
        %v1340 = vrot.slane %v1318, %v1339
        %v1342 = vunpack.c.l.s4 1966171168
        %v1343 = vunpack.c.0.s8 %v1342
        %v1344 = vlaneseq
        %v1345 = vshrl.u32 %v1344, 7
        %v1346 = vsub.s32 %v1343, %v1345
        %v1347 = vrot.slane %v1319, %v1346
        %v1348 = vcombine.high %v1326, %v1326
        %v1349 = vcombine.high %v1333, %v1333
        %v1350 = vcombine.high %v1340, %v1340
        %v1351 = vcombine.high %v1347, %v1347
        %1360 = vst [vmem:[%s319 + $0x1] sm:$0x1] %v1326
        %1361 = vst [vmem:[%s319 + $0x9] sm:$0x1] %v1340
        %1362 = vst [vmem:[%s319 + $0x11] sm:$0x1] %v1348
        %1363 = vst [vmem:[%s319 + $0x19] sm:$0x1] %v1350
        %1364 = vst [vmem:[%s319 + $0x21] sm:$0x1] %v1333
        %1365 = vst [vmem:[%s319 + $0x29] sm:$0x1] %v1347
        %1366 = vst [vmem:[%s319 + $0x31] sm:$0x1] %v1349
        %1367 = vst [vmem:[%s319 + $0x39] sm:$0x1] %v1351
        %v1368 = vrot.slane %v1057, 2
        %v1369 = vrot.slane %v1058, 1
        %v1370 = vsel %vm1073, %v1369, %v1368
        %v1371 = vsel %vm1076, %v1059, %v1370
        %v1372 = vrot.slane %v1060, 7
        %v1373 = vsel %vm1079, %v1372, %v1371
        %v1374 = vsel %vm1085, %v1373, 0
        %1376 = vmatprep.subr.mxu0 0.0
        %1377 = vmatpush1.msra.mxu0 0.0
        %1378 = vmatprep.subr.mxu0 0.0
        %1379 = vmatpush1.msra.mxu0 0.0
        %1380 = vmatprep.subr.mxu0 0.0
        %1381 = vmatpush1.msra.mxu0 0.0
        %1382 = vmatprep.subr.mxu0 0.0
        %1383 = vmatpush1.msra.mxu0 0.0
        %1384 = vmatprep.subr.mxu0 0.0
        %1385 = vmatpush1.msra.mxu0 0.0
        %1386 = vmatprep.subr.mxu0 0.0
        %1387 = vmatpush1.msra.mxu0 0.0
        %1388 = vmatprep.subr.mxu0 0.0
        %1389 = vmatpush1.msra.mxu0 0.0
        %1390 = vmatprep.subr.mxu0 0.0
        %1391 = vmatpush1.msra.mxu0 0.0
        %1392 = vmatprep.subr.mxu0 0.0
        %1393 = vmatpush1.msra.mxu0 0.0
        %1394 = vmatprep.subr.mxu0 0.0
        %1395 = vmatpush1.msra.mxu0 0.0
        %1396 = vmatprep.subr.mxu0 0.0
        %1397 = vmatpush1.msra.mxu0 0.0
        %1398 = vmatprep.subr.mxu0 0.0
        %1399 = vmatpush1.msra.mxu0 0.0
        %1400 = vmatprep.subr.mxu0 0.0
        %1401 = vmatpush1.msra.mxu0 0.0
        %1402 = vmatprep.subr.mxu0 0.0
        %1403 = vmatpush1.msra.mxu0 0.0
        %1404 = vmatprep.subr.mxu0 0.0
        %1405 = vmatpush1.msra.mxu0 0.0
        %1406 = vmatprep.subr.mxu0 0.0
        %1407 = vmatpush1.msra.mxu0 %v1374
        %1408 = vmatprep.subr.mxu0 0.0
        %1409 = vmatpush2.msra.mxu0 0.0
        %1410 = vmatprep.subr.mxu0 0.0
        %1411 = vmatpush2.msra.mxu0 0.0
        %1412 = vmatprep.subr.mxu0 0.0
        %1413 = vmatpush2.msra.mxu0 0.0
        %1414 = vmatprep.subr.mxu0 0.0
        %1415 = vmatpush2.msra.mxu0 0.0
        %1416 = vmatprep.subr.mxu0 0.0
        %1417 = vmatpush2.msra.mxu0 0.0
        %1418 = vmatprep.subr.mxu0 0.0
        %1419 = vmatpush2.msra.mxu0 0.0
        %1420 = vmatprep.subr.mxu0 0.0
        %1421 = vmatpush2.msra.mxu0 0.0
        %1422 = vmatprep.subr.mxu0 0.0
        %1423 = vmatpush2.msra.mxu0 0.0
        %1424 = vmatprep.subr.mxu0 0.0
        %1425 = vmatpush2.msra.mxu0 0.0
        %1426 = vmatprep.subr.mxu0 0.0
        %1427 = vmatpush2.msra.mxu0 0.0
        %1428 = vmatprep.subr.mxu0 0.0
        %1429 = vmatpush2.msra.mxu0 0.0
        %1430 = vmatprep.subr.mxu0 0.0
        %1431 = vmatpush2.msra.mxu0 0.0
        %1432 = vmatprep.subr.mxu0 0.0
        %1433 = vmatpush2.msra.mxu0 0.0
        %1434 = vmatprep.subr.mxu0 0.0
        %1435 = vmatpush2.msra.mxu0 0.0
        %1436 = vmatprep.subr.mxu0 0.0
        %1437 = vmatpush2.msra.mxu0 0.0
        %1438 = vmatprep.subr.mxu0 0.0
        %1439 = vmatpush2.msra.mxu0 0.0
        %1440 = vmatprep.mubr.f32.mxu0 0.0
        %1441 = vmatmul.mubr.f32.gmra.mxu0 %v1083
        %v1442 = vpop.f32.mrf.mxu0
        %v1443 = vadd.f32 %v1066, %v1442
        %v1444 = vpop.f32.mrf.mxu0
        %1445 = vdwg.mxu0
        %v1447 = vcombine.high %v1443, %v1443
        %v1449 = vunpack.c.l.s4 1966171168
        %v1450 = vunpack.c.0.s8 %v1449
        %v1451 = vlaneseq
        %v1452 = vshrl.u32 %v1451, 7
        %v1453 = vsub.s32 %v1450, %v1452
        %v1454 = vrot.slane %v1443, %v1453
        %v1456 = vunpack.c.l.s4 1966171168
        %v1457 = vunpack.c.0.s8 %v1456
        %v1458 = vlaneseq
        %v1459 = vshrl.u32 %v1458, 7
        %v1460 = vsub.s32 %v1457, %v1459
        %v1461 = vrot.slane %v1447, %v1460
        %v1462 = vcombine.high %v1454, %v1454
        %v1463 = vcombine.high %v1461, %v1461
        %v1465 = vunpack.c.l.s4 1966171168
        %v1466 = vunpack.c.0.s8 %v1465
        %v1467 = vlaneseq
        %v1468 = vshrl.u32 %v1467, 7
        %v1469 = vsub.s32 %v1466, %v1468
        %v1470 = vrot.slane %v1454, %v1469
        %v1472 = vunpack.c.l.s4 1966171168
        %v1473 = vunpack.c.0.s8 %v1472
        %v1474 = vlaneseq
        %v1475 = vshrl.u32 %v1474, 7
        %v1476 = vsub.s32 %v1473, %v1475
        %v1477 = vrot.slane %v1461, %v1476
        %v1479 = vunpack.c.l.s4 1966171168
        %v1480 = vunpack.c.0.s8 %v1479
        %v1481 = vlaneseq
        %v1482 = vshrl.u32 %v1481, 7
        %v1483 = vsub.s32 %v1480, %v1482
        %v1484 = vrot.slane %v1462, %v1483
        %v1486 = vunpack.c.l.s4 1966171168
        %v1487 = vunpack.c.0.s8 %v1486
        %v1488 = vlaneseq
        %v1489 = vshrl.u32 %v1488, 7
        %v1490 = vsub.s32 %v1487, %v1489
        %v1491 = vrot.slane %v1463, %v1490
        %v1492 = vcombine.high %v1470, %v1470
        %v1493 = vcombine.high %v1477, %v1477
        %v1494 = vcombine.high %v1484, %v1484
        %v1495 = vcombine.high %v1491, %v1491
        %1504 = vst [vmem:[%s319 + $0x2] sm:$0x1] %v1470
        %1505 = vst [vmem:[%s319 + $0xa] sm:$0x1] %v1484
        %1506 = vst [vmem:[%s319 + $0x12] sm:$0x1] %v1492
        %1507 = vst [vmem:[%s319 + $0x1a] sm:$0x1] %v1494
        %1508 = vst [vmem:[%s319 + $0x22] sm:$0x1] %v1477
        %1509 = vst [vmem:[%s319 + $0x2a] sm:$0x1] %v1491
        %1510 = vst [vmem:[%s319 + $0x32] sm:$0x1] %v1493
        %1511 = vst [vmem:[%s319 + $0x3a] sm:$0x1] %v1495
        %v1512 = vrot.slane %v1057, 3
        %v1513 = vrot.slane %v1058, 2
        %v1514 = vsel %vm1073, %v1513, %v1512
        %v1515 = vrot.slane %v1059, 1
        %v1516 = vsel %vm1076, %v1515, %v1514
        %v1517 = vsel %vm1079, %v1060, %v1516
        %v1518 = vsel %vm1085, %v1517, 0
        %1520 = vmatprep.subr.mxu0 0.0
        %1521 = vmatpush1.msra.mxu0 0.0
        %1522 = vmatprep.subr.mxu0 0.0
        %1523 = vmatpush1.msra.mxu0 0.0
        %1524 = vmatprep.subr.mxu0 0.0
        %1525 = vmatpush1.msra.mxu0 0.0
        %1526 = vmatprep.subr.mxu0 0.0
        %1527 = vmatpush1.msra.mxu0 0.0
        %1528 = vmatprep.subr.mxu0 0.0
        %1529 = vmatpush1.msra.mxu0 0.0
        %1530 = vmatprep.subr.mxu0 0.0
        %1531 = vmatpush1.msra.mxu0 0.0
        %1532 = vmatprep.subr.mxu0 0.0
        %1533 = vmatpush1.msra.mxu0 0.0
        %1534 = vmatprep.subr.mxu0 0.0
        %1535 = vmatpush1.msra.mxu0 0.0
        %1536 = vmatprep.subr.mxu0 0.0
        %1537 = vmatpush1.msra.mxu0 0.0
        %1538 = vmatprep.subr.mxu0 0.0
        %1539 = vmatpush1.msra.mxu0 0.0
        %1540 = vmatprep.subr.mxu0 0.0
        %1541 = vmatpush1.msra.mxu0 0.0
        %1542 = vmatprep.subr.mxu0 0.0
        %1543 = vmatpush1.msra.mxu0 0.0
        %1544 = vmatprep.subr.mxu0 0.0
        %1545 = vmatpush1.msra.mxu0 0.0
        %1546 = vmatprep.subr.mxu0 0.0
        %1547 = vmatpush1.msra.mxu0 0.0
        %1548 = vmatprep.subr.mxu0 0.0
        %1549 = vmatpush1.msra.mxu0 0.0
        %1550 = vmatprep.subr.mxu0 0.0
        %1551 = vmatpush1.msra.mxu0 %v1518
        %1552 = vmatprep.subr.mxu0 0.0
        %1553 = vmatpush2.msra.mxu0 0.0
        %1554 = vmatprep.subr.mxu0 0.0
        %1555 = vmatpush2.msra.mxu0 0.0
        %1556 = vmatprep.subr.mxu0 0.0
        %1557 = vmatpush2.msra.mxu0 0.0
        %1558 = vmatprep.subr.mxu0 0.0
        %1559 = vmatpush2.msra.mxu0 0.0
        %1560 = vmatprep.subr.mxu0 0.0
        %1561 = vmatpush2.msra.mxu0 0.0
        %1562 = vmatprep.subr.mxu0 0.0
        %1563 = vmatpush2.msra.mxu0 0.0
        %1564 = vmatprep.subr.mxu0 0.0
        %1565 = vmatpush2.msra.mxu0 0.0
        %1566 = vmatprep.subr.mxu0 0.0
        %1567 = vmatpush2.msra.mxu0 0.0
        %1568 = vmatprep.subr.mxu0 0.0
        %1569 = vmatpush2.msra.mxu0 0.0
        %1570 = vmatprep.subr.mxu0 0.0
        %1571 = vmatpush2.msra.mxu0 0.0
        %1572 = vmatprep.subr.mxu0 0.0
        %1573 = vmatpush2.msra.mxu0 0.0
        %1574 = vmatprep.subr.mxu0 0.0
        %1575 = vmatpush2.msra.mxu0 0.0
        %1576 = vmatprep.subr.mxu0 0.0
        %1577 = vmatpush2.msra.mxu0 0.0
        %1578 = vmatprep.subr.mxu0 0.0
        %1579 = vmatpush2.msra.mxu0 0.0
        %1580 = vmatprep.subr.mxu0 0.0
        %1581 = vmatpush2.msra.mxu0 0.0
        %1582 = vmatprep.subr.mxu0 0.0
        %1583 = vmatpush2.msra.mxu0 0.0
        %1584 = vmatprep.mubr.f32.mxu0 0.0
        %1585 = vmatmul.mubr.f32.gmra.mxu0 %v1083
        %v1586 = vpop.f32.mrf.mxu0
        %v1587 = vadd.f32 %v1066, %v1586
        %v1588 = vpop.f32.mrf.mxu0
        %1589 = vdwg.mxu0
        %v1591 = vcombine.high %v1587, %v1587
        %v1593 = vunpack.c.l.s4 1966171168
        %v1594 = vunpack.c.0.s8 %v1593
        %v1595 = vlaneseq
        %v1596 = vshrl.u32 %v1595, 7
        %v1597 = vsub.s32 %v1594, %v1596
        %v1598 = vrot.slane %v1587, %v1597
        %v1600 = vunpack.c.l.s4 1966171168
        %v1601 = vunpack.c.0.s8 %v1600
        %v1602 = vlaneseq
        %v1603 = vshrl.u32 %v1602, 7
        %v1604 = vsub.s32 %v1601, %v1603
        %v1605 = vrot.slane %v1591, %v1604
        %v1606 = vcombine.high %v1598, %v1598
        %v1607 = vcombine.high %v1605, %v1605
        %v1609 = vunpack.c.l.s4 1966171168
        %v1610 = vunpack.c.0.s8 %v1609
        %v1611 = vlaneseq
        %v1612 = vshrl.u32 %v1611, 7
        %v1613 = vsub.s32 %v1610, %v1612
        %v1614 = vrot.slane %v1598, %v1613
        %v1616 = vunpack.c.l.s4 1966171168
        %v1617 = vunpack.c.0.s8 %v1616
        %v1618 = vlaneseq
        %v1619 = vshrl.u32 %v1618, 7
        %v1620 = vsub.s32 %v1617, %v1619
        %v1621 = vrot.slane %v1605, %v1620
        %v1623 = vunpack.c.l.s4 1966171168
        %v1624 = vunpack.c.0.s8 %v1623
        %v1625 = vlaneseq
        %v1626 = vshrl.u32 %v1625, 7
        %v1627 = vsub.s32 %v1624, %v1626
        %v1628 = vrot.slane %v1606, %v1627
        %v1630 = vunpack.c.l.s4 1966171168
        %v1631 = vunpack.c.0.s8 %v1630
        %v1632 = vlaneseq
        %v1633 = vshrl.u32 %v1632, 7
        %v1634 = vsub.s32 %v1631, %v1633
        %v1635 = vrot.slane %v1607, %v1634
        %v1636 = vcombine.high %v1614, %v1614
        %v1637 = vcombine.high %v1621, %v1621
        %v1638 = vcombine.high %v1628, %v1628
        %v1639 = vcombine.high %v1635, %v1635
        %1648 = vst [vmem:[%s319 + $0x3] sm:$0x1] %v1614
        %1649 = vst [vmem:[%s319 + $0xb] sm:$0x1] %v1628
        %1650 = vst [vmem:[%s319 + $0x13] sm:$0x1] %v1636
        %1651 = vst [vmem:[%s319 + $0x1b] sm:$0x1] %v1638
        %1652 = vst [vmem:[%s319 + $0x23] sm:$0x1] %v1621
        %1653 = vst [vmem:[%s319 + $0x2b] sm:$0x1] %v1635
        %1654 = vst [vmem:[%s319 + $0x33] sm:$0x1] %v1637
        %1655 = vst [vmem:[%s319 + $0x3b] sm:$0x1] %v1639
        %v1656 = vrot.slane %v1057, 4
        %v1657 = vrot.slane %v1058, 3
        %v1658 = vsel %vm1073, %v1657, %v1656
        %v1659 = vrot.slane %v1059, 2
        %v1660 = vsel %vm1076, %v1659, %v1658
        %v1661 = vrot.slane %v1060, 1
        %v1662 = vsel %vm1079, %v1661, %v1660
        %v1663 = vsel %vm1085, %v1662, 0
        %1665 = vmatprep.subr.mxu0 0.0
        %1666 = vmatpush1.msra.mxu0 0.0
        %1667 = vmatprep.subr.mxu0 0.0
        %1668 = vmatpush1.msra.mxu0 0.0
        %1669 = vmatprep.subr.mxu0 0.0
        %1670 = vmatpush1.msra.mxu0 0.0
        %1671 = vmatprep.subr.mxu0 0.0
        %1672 = vmatpush1.msra.mxu0 0.0
        %1673 = vmatprep.subr.mxu0 0.0
        %1674 = vmatpush1.msra.mxu0 0.0
        %1675 = vmatprep.subr.mxu0 0.0
        %1676 = vmatpush1.msra.mxu0 0.0
        %1677 = vmatprep.subr.mxu0 0.0
        %1678 = vmatpush1.msra.mxu0 0.0
        %1679 = vmatprep.subr.mxu0 0.0
        %1680 = vmatpush1.msra.mxu0 0.0
        %1681 = vmatprep.subr.mxu0 0.0
        %1682 = vmatpush1.msra.mxu0 0.0
        %1683 = vmatprep.subr.mxu0 0.0
        %1684 = vmatpush1.msra.mxu0 0.0
        %1685 = vmatprep.subr.mxu0 0.0
        %1686 = vmatpush1.msra.mxu0 0.0
        %1687 = vmatprep.subr.mxu0 0.0
        %1688 = vmatpush1.msra.mxu0 0.0
        %1689 = vmatprep.subr.mxu0 0.0
        %1690 = vmatpush1.msra.mxu0 0.0
        %1691 = vmatprep.subr.mxu0 0.0
        %1692 = vmatpush1.msra.mxu0 0.0
        %1693 = vmatprep.subr.mxu0 0.0
        %1694 = vmatpush1.msra.mxu0 0.0
        %1695 = vmatprep.subr.mxu0 0.0
        %1696 = vmatpush1.msra.mxu0 %v1663
        %1697 = vmatprep.subr.mxu0 0.0
        %1698 = vmatpush2.msra.mxu0 0.0
        %1699 = vmatprep.subr.mxu0 0.0
        %1700 = vmatpush2.msra.mxu0 0.0
        %1701 = vmatprep.subr.mxu0 0.0
        %1702 = vmatpush2.msra.mxu0 0.0
        %1703 = vmatprep.subr.mxu0 0.0
        %1704 = vmatpush2.msra.mxu0 0.0
        %1705 = vmatprep.subr.mxu0 0.0
        %1706 = vmatpush2.msra.mxu0 0.0
        %1707 = vmatprep.subr.mxu0 0.0
        %1708 = vmatpush2.msra.mxu0 0.0
        %1709 = vmatprep.subr.mxu0 0.0
        %1710 = vmatpush2.msra.mxu0 0.0
        %1711 = vmatprep.subr.mxu0 0.0
        %1712 = vmatpush2.msra.mxu0 0.0
        %1713 = vmatprep.subr.mxu0 0.0
        %1714 = vmatpush2.msra.mxu0 0.0
        %1715 = vmatprep.subr.mxu0 0.0
        %1716 = vmatpush2.msra.mxu0 0.0
        %1717 = vmatprep.subr.mxu0 0.0
        %1718 = vmatpush2.msra.mxu0 0.0
        %1719 = vmatprep.subr.mxu0 0.0
        %1720 = vmatpush2.msra.mxu0 0.0
        %1721 = vmatprep.subr.mxu0 0.0
        %1722 = vmatpush2.msra.mxu0 0.0
        %1723 = vmatprep.subr.mxu0 0.0
        %1724 = vmatpush2.msra.mxu0 0.0
        %1725 = vmatprep.subr.mxu0 0.0
        %1726 = vmatpush2.msra.mxu0 0.0
        %1727 = vmatprep.subr.mxu0 0.0
        %1728 = vmatpush2.msra.mxu0 0.0
        %1729 = vmatprep.mubr.f32.mxu0 0.0
        %1730 = vmatmul.mubr.f32.gmra.mxu0 %v1083
        %v1731 = vpop.f32.mrf.mxu0
        %v1732 = vadd.f32 %v1066, %v1731
        %v1733 = vpop.f32.mrf.mxu0
        %1734 = vdwg.mxu0
        %v1736 = vcombine.high %v1732, %v1732
        %v1738 = vunpack.c.l.s4 1966171168
        %v1739 = vunpack.c.0.s8 %v1738
        %v1740 = vlaneseq
        %v1741 = vshrl.u32 %v1740, 7
        %v1742 = vsub.s32 %v1739, %v1741
        %v1743 = vrot.slane %v1732, %v1742
        %v1745 = vunpack.c.l.s4 1966171168
        %v1746 = vunpack.c.0.s8 %v1745
        %v1747 = vlaneseq
        %v1748 = vshrl.u32 %v1747, 7
        %v1749 = vsub.s32 %v1746, %v1748
        %v1750 = vrot.slane %v1736, %v1749
        %v1751 = vcombine.high %v1743, %v1743
        %v1752 = vcombine.high %v1750, %v1750
        %v1754 = vunpack.c.l.s4 1966171168
        %v1755 = vunpack.c.0.s8 %v1754
        %v1756 = vlaneseq
        %v1757 = vshrl.u32 %v1756, 7
        %v1758 = vsub.s32 %v1755, %v1757
        %v1759 = vrot.slane %v1743, %v1758
        %v1761 = vunpack.c.l.s4 1966171168
        %v1762 = vunpack.c.0.s8 %v1761
        %v1763 = vlaneseq
        %v1764 = vshrl.u32 %v1763, 7
        %v1765 = vsub.s32 %v1762, %v1764
        %v1766 = vrot.slane %v1750, %v1765
        %v1768 = vunpack.c.l.s4 1966171168
        %v1769 = vunpack.c.0.s8 %v1768
        %v1770 = vlaneseq
        %v1771 = vshrl.u32 %v1770, 7
        %v1772 = vsub.s32 %v1769, %v1771
        %v1773 = vrot.slane %v1751, %v1772
        %v1775 = vunpack.c.l.s4 1966171168
        %v1776 = vunpack.c.0.s8 %v1775
        %v1777 = vlaneseq
        %v1778 = vshrl.u32 %v1777, 7
        %v1779 = vsub.s32 %v1776, %v1778
        %v1780 = vrot.slane %v1752, %v1779
        %v1781 = vcombine.high %v1759, %v1759
        %v1782 = vcombine.high %v1766, %v1766
        %v1783 = vcombine.high %v1773, %v1773
        %v1784 = vcombine.high %v1780, %v1780
        %1793 = vst [vmem:[%s319 + $0x4] sm:$0x1] %v1759
        %1794 = vst [vmem:[%s319 + $0xc] sm:$0x1] %v1773
        %1795 = vst [vmem:[%s319 + $0x14] sm:$0x1] %v1781
        %1796 = vst [vmem:[%s319 + $0x1c] sm:$0x1] %v1783
        %1797 = vst [vmem:[%s319 + $0x24] sm:$0x1] %v1766
        %1798 = vst [vmem:[%s319 + $0x2c] sm:$0x1] %v1780
        %1799 = vst [vmem:[%s319 + $0x34] sm:$0x1] %v1782
        %1800 = vst [vmem:[%s319 + $0x3c] sm:$0x1] %v1784
        %v1801 = vrot.slane %v1057, 5
        %v1802 = vrot.slane %v1058, 4
        %v1803 = vsel %vm1073, %v1802, %v1801
        %v1804 = vrot.slane %v1059, 3
        %v1805 = vsel %vm1076, %v1804, %v1803
        %v1806 = vrot.slane %v1060, 2
        %v1807 = vsel %vm1079, %v1806, %v1805
        %v1808 = vsel %vm1085, %v1807, 0
        %1810 = vmatprep.subr.mxu0 0.0
        %1811 = vmatpush1.msra.mxu0 0.0
        %1812 = vmatprep.subr.mxu0 0.0
        %1813 = vmatpush1.msra.mxu0 0.0
        %1814 = vmatprep.subr.mxu0 0.0
        %1815 = vmatpush1.msra.mxu0 0.0
        %1816 = vmatprep.subr.mxu0 0.0
        %1817 = vmatpush1.msra.mxu0 0.0
        %1818 = vmatprep.subr.mxu0 0.0
        %1819 = vmatpush1.msra.mxu0 0.0
        %1820 = vmatprep.subr.mxu0 0.0
        %1821 = vmatpush1.msra.mxu0 0.0
        %1822 = vmatprep.subr.mxu0 0.0
        %1823 = vmatpush1.msra.mxu0 0.0
        %1824 = vmatprep.subr.mxu0 0.0
        %1825 = vmatpush1.msra.mxu0 0.0
        %1826 = vmatprep.subr.mxu0 0.0
        %1827 = vmatpush1.msra.mxu0 0.0
        %1828 = vmatprep.subr.mxu0 0.0
        %1829 = vmatpush1.msra.mxu0 0.0
        %1830 = vmatprep.subr.mxu0 0.0
        %1831 = vmatpush1.msra.mxu0 0.0
        %1832 = vmatprep.subr.mxu0 0.0
        %1833 = vmatpush1.msra.mxu0 0.0
        %1834 = vmatprep.subr.mxu0 0.0
        %1835 = vmatpush1.msra.mxu0 0.0
        %1836 = vmatprep.subr.mxu0 0.0
        %1837 = vmatpush1.msra.mxu0 0.0
        %1838 = vmatprep.subr.mxu0 0.0
        %1839 = vmatpush1.msra.mxu0 0.0
        %1840 = vmatprep.subr.mxu0 0.0
        %1841 = vmatpush1.msra.mxu0 %v1808
        %1842 = vmatprep.subr.mxu0 0.0
        %1843 = vmatpush2.msra.mxu0 0.0
        %1844 = vmatprep.subr.mxu0 0.0
        %1845 = vmatpush2.msra.mxu0 0.0
        %1846 = vmatprep.subr.mxu0 0.0
        %1847 = vmatpush2.msra.mxu0 0.0
        %1848 = vmatprep.subr.mxu0 0.0
        %1849 = vmatpush2.msra.mxu0 0.0
        %1850 = vmatprep.subr.mxu0 0.0
        %1851 = vmatpush2.msra.mxu0 0.0
        %1852 = vmatprep.subr.mxu0 0.0
        %1853 = vmatpush2.msra.mxu0 0.0
        %1854 = vmatprep.subr.mxu0 0.0
        %1855 = vmatpush2.msra.mxu0 0.0
        %1856 = vmatprep.subr.mxu0 0.0
        %1857 = vmatpush2.msra.mxu0 0.0
        %1858 = vmatprep.subr.mxu0 0.0
        %1859 = vmatpush2.msra.mxu0 0.0
        %1860 = vmatprep.subr.mxu0 0.0
        %1861 = vmatpush2.msra.mxu0 0.0
        %1862 = vmatprep.subr.mxu0 0.0
        %1863 = vmatpush2.msra.mxu0 0.0
        %1864 = vmatprep.subr.mxu0 0.0
        %1865 = vmatpush2.msra.mxu0 0.0
        %1866 = vmatprep.subr.mxu0 0.0
        %1867 = vmatpush2.msra.mxu0 0.0
        %1868 = vmatprep.subr.mxu0 0.0
        %1869 = vmatpush2.msra.mxu0 0.0
        %1870 = vmatprep.subr.mxu0 0.0
        %1871 = vmatpush2.msra.mxu0 0.0
        %1872 = vmatprep.subr.mxu0 0.0
        %1873 = vmatpush2.msra.mxu0 0.0
        %1874 = vmatprep.mubr.f32.mxu0 0.0
        %1875 = vmatmul.mubr.f32.gmra.mxu0 %v1083
        %v1876 = vpop.f32.mrf.mxu0
        %v1877 = vadd.f32 %v1066, %v1876
        %v1878 = vpop.f32.mrf.mxu0
        %1879 = vdwg.mxu0
        %v1881 = vcombine.high %v1877, %v1877
        %v1883 = vunpack.c.l.s4 1966171168
        %v1884 = vunpack.c.0.s8 %v1883
        %v1885 = vlaneseq
        %v1886 = vshrl.u32 %v1885, 7
        %v1887 = vsub.s32 %v1884, %v1886
        %v1888 = vrot.slane %v1877, %v1887
        %v1890 = vunpack.c.l.s4 1966171168
        %v1891 = vunpack.c.0.s8 %v1890
        %v1892 = vlaneseq
        %v1893 = vshrl.u32 %v1892, 7
        %v1894 = vsub.s32 %v1891, %v1893
        %v1895 = vrot.slane %v1881, %v1894
        %v1896 = vcombine.high %v1888, %v1888
        %v1897 = vcombine.high %v1895, %v1895
        %v1899 = vunpack.c.l.s4 1966171168
        %v1900 = vunpack.c.0.s8 %v1899
        %v1901 = vlaneseq
        %v1902 = vshrl.u32 %v1901, 7
        %v1903 = vsub.s32 %v1900, %v1902
        %v1904 = vrot.slane %v1888, %v1903
        %v1906 = vunpack.c.l.s4 1966171168
        %v1907 = vunpack.c.0.s8 %v1906
        %v1908 = vlaneseq
        %v1909 = vshrl.u32 %v1908, 7
        %v1910 = vsub.s32 %v1907, %v1909
        %v1911 = vrot.slane %v1895, %v1910
        %v1913 = vunpack.c.l.s4 1966171168
        %v1914 = vunpack.c.0.s8 %v1913
        %v1915 = vlaneseq
        %v1916 = vshrl.u32 %v1915, 7
        %v1917 = vsub.s32 %v1914, %v1916
        %v1918 = vrot.slane %v1896, %v1917
        %v1920 = vunpack.c.l.s4 1966171168
        %v1921 = vunpack.c.0.s8 %v1920
        %v1922 = vlaneseq
        %v1923 = vshrl.u32 %v1922, 7
        %v1924 = vsub.s32 %v1921, %v1923
        %v1925 = vrot.slane %v1897, %v1924
        %v1926 = vcombine.high %v1904, %v1904
        %v1927 = vcombine.high %v1911, %v1911
        %v1928 = vcombine.high %v1918, %v1918
        %v1929 = vcombine.high %v1925, %v1925
        %1938 = vst [vmem:[%s319 + $0x5] sm:$0x1] %v1904
        %1939 = vst [vmem:[%s319 + $0xd] sm:$0x1] %v1918
        %1940 = vst [vmem:[%s319 + $0x15] sm:$0x1] %v1926
        %1941 = vst [vmem:[%s319 + $0x1d] sm:$0x1] %v1928
        %1942 = vst [vmem:[%s319 + $0x25] sm:$0x1] %v1911
        %1943 = vst [vmem:[%s319 + $0x2d] sm:$0x1] %v1925
        %1944 = vst [vmem:[%s319 + $0x35] sm:$0x1] %v1927
        %1945 = vst [vmem:[%s319 + $0x3d] sm:$0x1] %v1929
        %v1946 = vrot.slane %v1057, 6
        %v1947 = vrot.slane %v1058, 5
        %v1948 = vsel %vm1073, %v1947, %v1946
        %v1949 = vrot.slane %v1059, 4
        %v1950 = vsel %vm1076, %v1949, %v1948
        %v1951 = vrot.slane %v1060, 3
        %v1952 = vsel %vm1079, %v1951, %v1950
        %v1953 = vsel %vm1085, %v1952, 0
        %1955 = vmatprep.subr.mxu0 0.0
        %1956 = vmatpush1.msra.mxu0 0.0
        %1957 = vmatprep.subr.mxu0 0.0
        %1958 = vmatpush1.msra.mxu0 0.0
        %1959 = vmatprep.subr.mxu0 0.0
        %1960 = vmatpush1.msra.mxu0 0.0
        %1961 = vmatprep.subr.mxu0 0.0
        %1962 = vmatpush1.msra.mxu0 0.0
        %1963 = vmatprep.subr.mxu0 0.0
        %1964 = vmatpush1.msra.mxu0 0.0
        %1965 = vmatprep.subr.mxu0 0.0
        %1966 = vmatpush1.msra.mxu0 0.0
        %1967 = vmatprep.subr.mxu0 0.0
        %1968 = vmatpush1.msra.mxu0 0.0
        %1969 = vmatprep.subr.mxu0 0.0
        %1970 = vmatpush1.msra.mxu0 0.0
        %1971 = vmatprep.subr.mxu0 0.0
        %1972 = vmatpush1.msra.mxu0 0.0
        %1973 = vmatprep.subr.mxu0 0.0
        %1974 = vmatpush1.msra.mxu0 0.0
        %1975 = vmatprep.subr.mxu0 0.0
        %1976 = vmatpush1.msra.mxu0 0.0
        %1977 = vmatprep.subr.mxu0 0.0
        %1978 = vmatpush1.msra.mxu0 0.0
        %1979 = vmatprep.subr.mxu0 0.0
        %1980 = vmatpush1.msra.mxu0 0.0
        %1981 = vmatprep.subr.mxu0 0.0
        %1982 = vmatpush1.msra.mxu0 0.0
        %1983 = vmatprep.subr.mxu0 0.0
        %1984 = vmatpush1.msra.mxu0 0.0
        %1985 = vmatprep.subr.mxu0 0.0
        %1986 = vmatpush1.msra.mxu0 %v1953
        %1987 = vmatprep.subr.mxu0 0.0
        %1988 = vmatpush2.msra.mxu0 0.0
        %1989 = vmatprep.subr.mxu0 0.0
        %1990 = vmatpush2.msra.mxu0 0.0
        %1991 = vmatprep.subr.mxu0 0.0
        %1992 = vmatpush2.msra.mxu0 0.0
        %1993 = vmatprep.subr.mxu0 0.0
        %1994 = vmatpush2.msra.mxu0 0.0
        %1995 = vmatprep.subr.mxu0 0.0
        %1996 = vmatpush2.msra.mxu0 0.0
        %1997 = vmatprep.subr.mxu0 0.0
        %1998 = vmatpush2.msra.mxu0 0.0
        %1999 = vmatprep.subr.mxu0 0.0
        %2000 = vmatpush2.msra.mxu0 0.0
        %2001 = vmatprep.subr.mxu0 0.0
        %2002 = vmatpush2.msra.mxu0 0.0
        %2003 = vmatprep.subr.mxu0 0.0
        %2004 = vmatpush2.msra.mxu0 0.0
        %2005 = vmatprep.subr.mxu0 0.0
        %2006 = vmatpush2.msra.mxu0 0.0
        %2007 = vmatprep.subr.mxu0 0.0
        %2008 = vmatpush2.msra.mxu0 0.0
        %2009 = vmatprep.subr.mxu0 0.0
        %2010 = vmatpush2.msra.mxu0 0.0
        %2011 = vmatprep.subr.mxu0 0.0
        %2012 = vmatpush2.msra.mxu0 0.0
        %2013 = vmatprep.subr.mxu0 0.0
        %2014 = vmatpush2.msra.mxu0 0.0
        %2015 = vmatprep.subr.mxu0 0.0
        %2016 = vmatpush2.msra.mxu0 0.0
        %2017 = vmatprep.subr.mxu0 0.0
        %2018 = vmatpush2.msra.mxu0 0.0
        %2019 = vmatprep.mubr.f32.mxu0 0.0
        %2020 = vmatmul.mubr.f32.gmra.mxu0 %v1083
        %v2021 = vpop.f32.mrf.mxu0
        %v2022 = vadd.f32 %v1066, %v2021
        %v2023 = vpop.f32.mrf.mxu0
        %2024 = vdwg.mxu0
        %v2026 = vcombine.high %v2022, %v2022
        %v2028 = vunpack.c.l.s4 1966171168
        %v2029 = vunpack.c.0.s8 %v2028
        %v2030 = vlaneseq
        %v2031 = vshrl.u32 %v2030, 7
        %v2032 = vsub.s32 %v2029, %v2031
        %v2033 = vrot.slane %v2022, %v2032
        %v2035 = vunpack.c.l.s4 1966171168
        %v2036 = vunpack.c.0.s8 %v2035
        %v2037 = vlaneseq
        %v2038 = vshrl.u32 %v2037, 7
        %v2039 = vsub.s32 %v2036, %v2038
        %v2040 = vrot.slane %v2026, %v2039
        %v2041 = vcombine.high %v2033, %v2033
        %v2042 = vcombine.high %v2040, %v2040
        %v2044 = vunpack.c.l.s4 1966171168
        %v2045 = vunpack.c.0.s8 %v2044
        %v2046 = vlaneseq
        %v2047 = vshrl.u32 %v2046, 7
        %v2048 = vsub.s32 %v2045, %v2047
        %v2049 = vrot.slane %v2033, %v2048
        %v2051 = vunpack.c.l.s4 1966171168
        %v2052 = vunpack.c.0.s8 %v2051
        %v2053 = vlaneseq
        %v2054 = vshrl.u32 %v2053, 7
        %v2055 = vsub.s32 %v2052, %v2054
        %v2056 = vrot.slane %v2040, %v2055
        %v2058 = vunpack.c.l.s4 1966171168
        %v2059 = vunpack.c.0.s8 %v2058
        %v2060 = vlaneseq
        %v2061 = vshrl.u32 %v2060, 7
        %v2062 = vsub.s32 %v2059, %v2061
        %v2063 = vrot.slane %v2041, %v2062
        %v2065 = vunpack.c.l.s4 1966171168
        %v2066 = vunpack.c.0.s8 %v2065
        %v2067 = vlaneseq
        %v2068 = vshrl.u32 %v2067, 7
        %v2069 = vsub.s32 %v2066, %v2068
        %v2070 = vrot.slane %v2042, %v2069
        %v2071 = vcombine.high %v2049, %v2049
        %v2072 = vcombine.high %v2056, %v2056
        %v2073 = vcombine.high %v2063, %v2063
        %v2074 = vcombine.high %v2070, %v2070
        %2083 = vst [vmem:[%s319 + $0x6] sm:$0x1] %v2049
        %2084 = vst [vmem:[%s319 + $0xe] sm:$0x1] %v2063
        %2085 = vst [vmem:[%s319 + $0x16] sm:$0x1] %v2071
        %2086 = vst [vmem:[%s319 + $0x1e] sm:$0x1] %v2073
        %2087 = vst [vmem:[%s319 + $0x26] sm:$0x1] %v2056
        %2088 = vst [vmem:[%s319 + $0x2e] sm:$0x1] %v2070
        %2089 = vst [vmem:[%s319 + $0x36] sm:$0x1] %v2072
        %2090 = vst [vmem:[%s319 + $0x3e] sm:$0x1] %v2074
        %v2091 = vrot.slane %v1057, 7
        %v2092 = vrot.slane %v1058, 6
        %v2093 = vsel %vm1073, %v2092, %v2091
        %v2094 = vrot.slane %v1059, 5
        %v2095 = vsel %vm1076, %v2094, %v2093
        %v2096 = vrot.slane %v1060, 4
        %v2097 = vsel %vm1079, %v2096, %v2095
        %v2098 = vsel %vm1085, %v2097, 0
        %2100 = vmatprep.subr.mxu0 0.0
        %2101 = vmatpush1.msra.mxu0 0.0
        %2102 = vmatprep.subr.mxu0 0.0
        %2103 = vmatpush1.msra.mxu0 0.0
        %2104 = vmatprep.subr.mxu0 0.0
        %2105 = vmatpush1.msra.mxu0 0.0
        %2106 = vmatprep.subr.mxu0 0.0
        %2107 = vmatpush1.msra.mxu0 0.0
        %2108 = vmatprep.subr.mxu0 0.0
        %2109 = vmatpush1.msra.mxu0 0.0
        %2110 = vmatprep.subr.mxu0 0.0
        %2111 = vmatpush1.msra.mxu0 0.0
        %2112 = vmatprep.subr.mxu0 0.0
        %2113 = vmatpush1.msra.mxu0 0.0
        %2114 = vmatprep.subr.mxu0 0.0
        %2115 = vmatpush1.msra.mxu0 0.0
        %2116 = vmatprep.subr.mxu0 0.0
        %2117 = vmatpush1.msra.mxu0 0.0
        %2118 = vmatprep.subr.mxu0 0.0
        %2119 = vmatpush1.msra.mxu0 0.0
        %2120 = vmatprep.subr.mxu0 0.0
        %2121 = vmatpush1.msra.mxu0 0.0
        %2122 = vmatprep.subr.mxu0 0.0
        %2123 = vmatpush1.msra.mxu0 0.0
        %2124 = vmatprep.subr.mxu0 0.0
        %2125 = vmatpush1.msra.mxu0 0.0
        %2126 = vmatprep.subr.mxu0 0.0
        %2127 = vmatpush1.msra.mxu0 0.0
        %2128 = vmatprep.subr.mxu0 0.0
        %2129 = vmatpush1.msra.mxu0 0.0
        %2130 = vmatprep.subr.mxu0 0.0
        %2131 = vmatpush1.msra.mxu0 %v2098
        %2132 = vmatprep.subr.mxu0 0.0
        %2133 = vmatpush2.msra.mxu0 0.0
        %2134 = vmatprep.subr.mxu0 0.0
        %2135 = vmatpush2.msra.mxu0 0.0
        %2136 = vmatprep.subr.mxu0 0.0
        %2137 = vmatpush2.msra.mxu0 0.0
        %2138 = vmatprep.subr.mxu0 0.0
        %2139 = vmatpush2.msra.mxu0 0.0
        %2140 = vmatprep.subr.mxu0 0.0
        %2141 = vmatpush2.msra.mxu0 0.0
        %2142 = vmatprep.subr.mxu0 0.0
        %2143 = vmatpush2.msra.mxu0 0.0
        %2144 = vmatprep.subr.mxu0 0.0
        %2145 = vmatpush2.msra.mxu0 0.0
        %2146 = vmatprep.subr.mxu0 0.0
        %2147 = vmatpush2.msra.mxu0 0.0
        %2148 = vmatprep.subr.mxu0 0.0
        %2149 = vmatpush2.msra.mxu0 0.0
        %2150 = vmatprep.subr.mxu0 0.0
        %2151 = vmatpush2.msra.mxu0 0.0
        %2152 = vmatprep.subr.mxu0 0.0
        %2153 = vmatpush2.msra.mxu0 0.0
        %2154 = vmatprep.subr.mxu0 0.0
        %2155 = vmatpush2.msra.mxu0 0.0
        %2156 = vmatprep.subr.mxu0 0.0
        %2157 = vmatpush2.msra.mxu0 0.0
        %2158 = vmatprep.subr.mxu0 0.0
        %2159 = vmatpush2.msra.mxu0 0.0
        %2160 = vmatprep.subr.mxu0 0.0
        %2161 = vmatpush2.msra.mxu0 0.0
        %2162 = vmatprep.subr.mxu0 0.0
        %2163 = vmatpush2.msra.mxu0 0.0
        %2164 = vmatprep.mubr.f32.mxu0 0.0
        %2165 = vmatmul.mubr.f32.gmra.mxu0 %v1083
        %v2166 = vpop.f32.mrf.mxu0
        %v2167 = vadd.f32 %v1066, %v2166
        %v2168 = vpop.f32.mrf.mxu0
        %2169 = vdwg.mxu0
        %v2171 = vcombine.high %v2167, %v2167
        %v2173 = vunpack.c.l.s4 1966171168
        %v2174 = vunpack.c.0.s8 %v2173
        %v2175 = vlaneseq
        %v2176 = vshrl.u32 %v2175, 7
        %v2177 = vsub.s32 %v2174, %v2176
        %v2178 = vrot.slane %v2167, %v2177
        %v2180 = vunpack.c.l.s4 1966171168
        %v2181 = vunpack.c.0.s8 %v2180
        %v2182 = vlaneseq
        %v2183 = vshrl.u32 %v2182, 7
        %v2184 = vsub.s32 %v2181, %v2183
        %v2185 = vrot.slane %v2171, %v2184
        %v2186 = vcombine.high %v2178, %v2178
        %v2187 = vcombine.high %v2185, %v2185
        %v2189 = vunpack.c.l.s4 1966171168
        %v2190 = vunpack.c.0.s8 %v2189
        %v2191 = vlaneseq
        %v2192 = vshrl.u32 %v2191, 7
        %v2193 = vsub.s32 %v2190, %v2192
        %v2194 = vrot.slane %v2178, %v2193
        %v2196 = vunpack.c.l.s4 1966171168
        %v2197 = vunpack.c.0.s8 %v2196
        %v2198 = vlaneseq
        %v2199 = vshrl.u32 %v2198, 7
        %v2200 = vsub.s32 %v2197, %v2199
        %v2201 = vrot.slane %v2185, %v2200
        %v2203 = vunpack.c.l.s4 1966171168
        %v2204 = vunpack.c.0.s8 %v2203
        %v2205 = vlaneseq
        %v2206 = vshrl.u32 %v2205, 7
        %v2207 = vsub.s32 %v2204, %v2206
        %v2208 = vrot.slane %v2186, %v2207
        %v2210 = vunpack.c.l.s4 1966171168
        %v2211 = vunpack.c.0.s8 %v2210
        %v2212 = vlaneseq
        %v2213 = vshrl.u32 %v2212, 7
        %v2214 = vsub.s32 %v2211, %v2213
        %v2215 = vrot.slane %v2187, %v2214
        %v2216 = vcombine.high %v2194, %v2194
        %v2217 = vcombine.high %v2201, %v2201
        %v2218 = vcombine.high %v2208, %v2208
        %v2219 = vcombine.high %v2215, %v2215
        %2228 = vst [vmem:[%s319 + $0x7] sm:$0x1] %v2194
        %2229 = vst [vmem:[%s319 + $0xf] sm:$0x1] %v2208
        %2230 = vst [vmem:[%s319 + $0x17] sm:$0x1] %v2216
        %2231 = vst [vmem:[%s319 + $0x1f] sm:$0x1] %v2218
        %2232 = vst [vmem:[%s319 + $0x27] sm:$0x1] %v2201
        %2233 = vst [vmem:[%s319 + $0x2f] sm:$0x1] %v2215
        %2234 = vst [vmem:[%s319 + $0x37] sm:$0x1] %v2217
        %2235 = vst [vmem:[%s319 + $0x3f] sm:$0x1] %v2219
        %s2236 = sand.u32 %s168, 1
        %s2237 = scalar_lea.sflag [#allocation5], %s2236
        %s2238 = sand.u32 %s168, 1
        %s2239 = smul.addr %s2238, 64
        %s2240 = scalar_lea.vmem [#allocation9], %s2239
        // Predicated region
        $region53: #{tpu_custom_call.1} parent=39 // pred_check
          %p2241 = pneg %p178
        $region54: #{tpu_custom_call.1} parent=39 // pred_check_branch
          %2243 = sbr.rel (%p2241) target = $region56
        $region55: #{tpu_custom_call.1} parent=39 // pred_region
          %s2245 = ssub.s32 1024, 1024
          %2246 = vsyncadd %s2237, %s2245
          %s2247 = smul.addr %s29, 8
          %s2248 = sadd.s32 %s30, %s2247
          %s2249 = smul.addr %s2248, 128
          %s2250 = scalar_lea.hbm %s5, %s2249
          %s2251 = sshll.u32 %s2240, 4
          %s2252 = int_to_ptr.vmem [resolvable:$true] %s2251
          %2257 = dma.vmem_to_hbm [thread:$0]  %s2252, 1024, %s2250, %s2237, 128, 128, 8
        $region56: #{tpu_custom_call.1} parent=39 // pred_fallthru
          _
      $region40: #{tpu_custom_call.1} parent=5 // pred_fallthru
        _
      %p2258 = scmp.le.s32.totalorder 2, %s20
      // Predicated region
      $region57: #{tpu_custom_call.1} parent=5 // pred_check
        %p2259 = pneg %p2258
      $region58: #{tpu_custom_call.1} parent=5 // pred_check_branch
        %2261 = sbr.rel (%p2259) target = $region60
      $region59: #{tpu_custom_call.1} parent=5 // pred_region
        %s2262 = ssub.s32 %s20, 2
        // Predicated region
        $region61: #{tpu_custom_call.1} parent=59 // pred_check
          %p2263 = pneg %p184
        $region62: #{tpu_custom_call.1} parent=59 // pred_check_branch
          %2265 = sbr.rel (%p2263) target = $region64
        $region63: #{tpu_custom_call.1} parent=59 // pred_region
          %s2266 = sand.u32 %s169, 1
          %s2267 = scalar_lea.sflag [#allocation5], %s2266
          %s2268 = sand.u32 %s169, 1
          %s2269 = smul.addr %s2268, 64
          %s2270 = scalar_lea.vmem [#allocation9], %s2269
          %2271 = dma.done %s2267, 1024
        $region64: #{tpu_custom_call.1} parent=59 // pred_fallthru
          _
      $region60: #{tpu_custom_call.1} parent=5 // pred_fallthru
        _
    $region6: #{tpu_custom_call.1} parent=1 // loop_footer
      %s24 = sadd.s32 1, %s20
    $region7: #{tpu_custom_call.1} parent=1 // loop_footer_branch
      %19 = sbr.rel target = $region3
    $region8: #{tpu_custom_call.1} parent=1 // loop_exit
      _
    %2272 = vsyncpa [#allocation4], 1
    %s2273 = scalar_lea.sflag [#allocation4], 1
    %2274 = vsyncpa %s2273, 1
    %2275 = vsyncpa [#allocation7], 1
    %s2276 = scalar_lea.sflag [#allocation7], 1
    %2277 = vsyncpa %s2276, 1
    %2278 = vsyncpa [#allocation5], 1
    %s2279 = scalar_lea.sflag [#allocation5], 1
    %2280 = vsyncpa %s2279, 1

</llo_original>
